<compile_context>
chip_gen: v5e
topology: v5e:2x2
jax: 0.10.0
libtpu: 0.0.40
codegen_flags: <defaults>
</compile_context>

<pallas_src>
import numpy as np
import jax
import jax.numpy as jnp
from jax import lax
from jax.experimental import pallas as pl
from jax.experimental.pallas import tpu as pltpu

NUM_DIMS = 3          # 'baseline' Localizer with 3x3 rotations / quaternions
_PI = 3.14159265358979323846
_EPS = 1e-7


# ----------------------- in-kernel elementwise helpers -----------------------
def _atan_poly(x):
    z = x * x
    p = ((8.05374449538e-2 * z - 1.38776856032e-1) * z
         + 1.99777106478e-1) * z - 3.33329491539e-1
    return p * z * x + x


def _atan(x):
    sgn = jnp.where(x < 0.0, -1.0, 1.0)
    ax = jnp.abs(x)
    big = ax > 2.414213562373095      # tan(3*pi/8)
    mid = ax > 0.4142135623730951     # tan(pi/8)
    # exact divides on the angle path (accuracy feedback: no approx reciprocals)
    xr = jnp.where(big, -1.0 / jnp.maximum(ax, 1.0),
                   jnp.where(mid, (ax - 1.0) / (ax + 1.0), ax))
    off = jnp.where(big, _PI / 2.0, jnp.where(mid, _PI / 4.0, 0.0))
    return sgn * (off + _atan_poly(xr))


def _atan2(y, x):
    safe_x = jnp.where(x == 0.0, 1.0, x)
    a = _atan(y / safe_x)
    a = jnp.where(x < 0.0, jnp.where(y >= 0.0, a + _PI, a - _PI), a)
    a = jnp.where(x == 0.0,
                  jnp.where(y > 0.0, _PI / 2.0,
                            jnp.where(y < 0.0, -_PI / 2.0, 0.0)),
                  a)
    return a


def _rotation_rows(vx, vy, vz):
    """velocity_to_rotation_matrix: 9 row-major entries of R (elementwise)."""
    hyp2 = vx * vx + vy * vy
    rho = jnp.sqrt(hyp2 + vz * vz)
    has_xy = hyp2 > 0.0
    inv_hyp = lax.rsqrt(jnp.where(has_xy, hyp2, 1.0))   # no NaN in untaken branch
    ct = jnp.where(has_xy, vx * inv_hyp, 1.0)           # cos(atan2(vy, vx))
    st = jnp.where(has_xy, vy * inv_hyp, 0.0)           # sin(atan2(vy, vx))
    cp = jnp.clip(vz / (rho + _EPS), -1.0, 1.0)          # cos(acos(.)), ref keeps +eps
    sp = jnp.sqrt(jnp.maximum(1.0 - cp * cp, 0.0))
    zero = jnp.zeros_like(ct)
    return (cp * ct, -st, sp * ct,
            cp * st, ct, sp * st,
            -sp, zero, cp)


# --------------------------------- kernel ------------------------------------
# Grid step = (batch b, sender s).  Lane axis = receiver/node index.
def _localizer_kernel(xv_ref, seq_tn_ref, seq_s_ref, xs_ref,
                      r_ref, canon_ref, edge_ref):
    s = pl.program_id(1)
    T = seq_tn_ref.shape[2]

    # ---- receiver-side rotation rows (node index in the 128-lane axis) ----
    xv = xv_ref[0]                                        # [3, N]
    (r00, r01, r02,
     r10, r11, r12,
     r20, r21, r22) = _rotation_rows(xv[0:1, :], xv[1:2, :], xv[2:3, :])

    # ---- node-level outputs: written once per batch (s-invariant blocks) ----
    @pl.when(s == 0)
    def _():
        r_ref[0] = jnp.concatenate(
            [r00, r01, r02, r10, r11, r12, r20, r21, r22], axis=0)    # [9, N]
        px, py, pz = seq_tn_ref[0, 0], seq_tn_ref[0, 1], seq_tn_ref[0, 2]  # [T,N]
        vx, vy, vz = seq_tn_ref[0, 3], seq_tn_ref[0, 4], seq_tn_ref[0, 5]
        rpx = px - px[T - 1:T, :]                         # relative to last step
        rpy = py - py[T - 1:T, :]
        rpz = pz - pz[T - 1:T, :]
        # canon = R^T @ v  =>  out_i = sum_j R[j, i] * v_j   (implicit [1,N] bcast)
        canon_ref[0, 0] = r00 * rpx + r10 * rpy + r20 * rpz
        canon_ref[0, 1] = r01 * rpx + r11 * rpy + r21 * rpz
        canon_ref[0, 2] = r02 * rpx + r12 * rpy + r22 * rpz
        canon_ref[0, 3] = r00 * vx + r10 * vy + r20 * vz
        canon_ref[0, 4] = r01 * vx + r11 * vy + r21 * vz
        canon_ref[0, 5] = r02 * vx + r12 * vy + r22 * vz

    # ---- sender trajectory ([T,1] columns) and sender rotation (scalars) ----
    seq_s = seq_s_ref[0, 0]                               # [T, 6]
    psx, psy, psz = seq_s[:, 0:1], seq_s[:, 1:2], seq_s[:, 2:3]
    vsx, vsy, vsz = seq_s[:, 3:4], seq_s[:, 4:5], seq_s[:, 5:6]
    xs = xs_ref[0, 0]                                     # [1, 6] current state
    (s00, s01, s02,
     s10, s11, s12,
     s20, s21, s22) = _rotation_rows(xs[:, 3:4], xs[:, 4:5], xs[:, 5:6])

    # receiver last-step positions ([1, N], node in lanes)
    pix = seq_tn_ref[0, 0, T - 1:T, :]
    piy = seq_tn_ref[0, 1, T - 1:T, :]
    piz = seq_tn_ref[0, 2, T - 1:T, :]

    # relative positions: sender trajectory minus receiver last position  [T, N]
    rx = psx - pix
    ry = psy - piy
    rz = psz - piz

    dist = jnp.sqrt(rx * rx + ry * ry + rz * rz)          # == |u| (norm-preserving)

    # u = recv_R^T @ r
    ux = r00 * rx + r10 * ry + r20 * rz
    uy = r01 * rx + r11 * ry + r21 * rz
    uz = r02 * rx + r12 * ry + r22 * rz

    theta = _atan2(uy, ux)                                # symmetric azimuth
    phi = _atan2(jnp.sqrt(ux * ux + uy * uy), uz)         # == acos(uz / |u|)

    # w = recv_R^T @ v_send(t)
    wx = r00 * vsx + r10 * vsy + r20 * vsz
    wy = r01 * vsx + r11 * vsy + r21 * vsz
    wz = r02 * vsx + r12 * vsy + r22 * vsz

    # quaternion of M = recv_R^T @ send_R  (per receiver lane, [1, N])
    rcol = ((r00, r10, r20), (r01, r11, r21), (r02, r12, r22))  # rcol[p][k]=R[k,p]
    scol = ((s00, s10, s20), (s01, s11, s21), (s02, s12, s22))  # scol[q][k]=S[k,q]

    def M(p, q):
        a, b = rcol[p], scol[q]
        return a[0] * b[0] + a[1] * b[1] + a[2] * b[2]

    m00, m11, m22 = M(0, 0), M(1, 1), M(2, 2)
    qw = jnp.sqrt(jnp.maximum(1.0 + m00 + m11 + m22, 1e-8)) * 0.5
    qx = jnp.sqrt(jnp.maximum(1.0 + m00 - m11 - m22, 1e-8)) * 0.5
    qy = jnp.sqrt(jnp.maximum(1.0 - m00 + m11 - m22, 1e-8)) * 0.5
    qz = jnp.sqrt(jnp.maximum(1.0 - m00 - m11 + m22, 1e-8)) * 0.5
    qx = jnp.where(M(2, 1) - M(1, 2) < 0.0, -qx, qx)
    qy = jnp.where(M(0, 2) - M(2, 0) < 0.0, -qy, qy)
    qz = jnp.where(M(1, 0) - M(0, 1) < 0.0, -qz, qz)

    # ---- single merged, lane-dense output slab (blocked rows; see _build_perm) --
    edge_ref[0, 0, 0 * T:1 * T, :] = ux
    edge_ref[0, 0, 1 * T:2 * T, :] = uy
    edge_ref[0, 0, 2 * T:3 * T, :] = uz
    edge_ref[0, 0, 3 * T:4 * T, :] = dist
    edge_ref[0, 0, 4 * T:5 * T, :] = theta
    edge_ref[0, 0, 5 * T:6 * T, :] = phi
    edge_ref[0, 0, 6 * T:7 * T, :] = wx
    edge_ref[0, 0, 7 * T:8 * T, :] = wy
    edge_ref[0, 0, 8 * T:9 * T, :] = wz
    edge_ref[0, 0, 9 * T:9 * T + 4, :] = jnp.concatenate([qw, qx, qy, qz], axis=0)


# ------------------------------ pallas wrapper -------------------------------
def _vmem_limit_bytes(working_set_bytes):
    # Shape-aware limit, capped by the per-generation VMEM capacity (v7x = 64 MiB).
    try:
        cap = int(pltpu.get_tpu_info().vmem_capacity_bytes)
    except Exception:
        cap = 64 * 1024 * 1024
    want = int(working_set_bytes) + (8 << 20)       # headroom for compiler temps
    return int(min(max(want, 16 << 20), (cap * 3) // 4))


def _localizer_pallas(xv_cn, seq_tn, seq_ntf, xs):
    B, _, N = xv_cn.shape
    T = seq_tn.shape[2]
    Fb = 9 * T + 4
    f32 = jnp.float32
    idx_b3 = lambda b, s: (b, 0, 0)
    idx_b4 = lambda b, s: (b, 0, 0, 0)
    idx_bs = lambda b, s: (b, s, 0, 0)

    # per-step resident blocks, double-buffered by the pipeline
    block_bytes = 4 * (3 * N + 6 * T * N + T * 6 + 6         # inputs
                       + 9 * N + 6 * T * N + Fb * N)         # outputs
    params = pltpu.CompilerParams(
        dimension_semantics=("parallel", "arbitrary"),
        vmem_limit_bytes=_vmem_limit_bytes(2 * block_bytes))

    return pl.pallas_call(
        _localizer_kernel,
        out_shape=(jax.ShapeDtypeStruct((B, 9, N), f32),         # R rows (lane-major)
                   jax.ShapeDtypeStruct((B, 6, T, N), f32),      # canonicalized seq
                   jax.ShapeDtypeStruct((B, N, Fb, N), f32)),    # merged edge slab
        grid=(B, N),
        in_specs=[pl.BlockSpec((1, 3, N), idx_b3),               # node velocities
                  pl.BlockSpec((1, 6, T, N), idx_b4),            # seq, node in lanes
                  pl.BlockSpec((1, 1, T, 6), idx_bs),            # sender trajectory
                  pl.BlockSpec((1, 1, 1, 6), idx_bs)],           # sender current state
        out_specs=(pl.BlockSpec((1, 9, N), idx_b3),
                   pl.BlockSpec((1, 6, T, N), idx_b4),
                   pl.BlockSpec((1, 1, Fb, N), idx_bs)),
        compiler_params=params,
    )(xv_cn, seq_tn, seq_ntf, xs)


def _build_perm(T):
    """Static map: final edge-feature index -> blocked slab row index."""
    perm = []
    for t in range(T):                       # rotated relative positions (t-major)
        for d in range(3):
            perm.append(d * T + t)
    for k in range(4):                       # quaternion
        perm.append(9 * T + k)
    for t in range(T):                       # node distance
        perm.append(3 * T + t)
    for t in range(T):                       # spherical angles (theta, phi per t)
        for a in range(2):
            perm.append((4 + a) * T + t)
    for t in range(T):                       # rotated velocities (t-major)
        for d in range(3):
            perm.append((6 + d) * T + t)
    return np.asarray(perm, dtype=np.int32)


# ------------------------------- forward (glue) -------------------------------
def localizer_forward(x, charges, sequence):
    """Localizer.forward (type='baseline', num_dims=3).

    x: [B, N, 2D], charges: [B, N, 1], sequence: [B, N, T, 2D]  (D = 3)
    returns (rel_feat [B,N,6T+1], R [B,N,3,3], edge_attr [B,E,15T+6])
    """
    D = NUM_DIMS
    B, N, T, _ = sequence.shape
    f32 = jnp.float32
    Fb = 9 * T + 4

    send_np, recv_np = np.where(~np.eye(N, dtype=bool))      # reference edge order
    pair_idx = jnp.asarray(send_np * N + recv_np, dtype=jnp.int32)
    send = jnp.asarray(send_np, dtype=jnp.int32)
    recv = jnp.asarray(recv_np, dtype=jnp.int32)
    perm = jnp.asarray(_build_perm(T), dtype=jnp.int32)

    seq = sequence[..., :2 * D].astype(f32)                   # [B, N, T, 6]
    seq_tn = jnp.transpose(seq, (0, 3, 2, 1))                 # [B, 6, T, N] (tiny)
    xv_cn = jnp.transpose(x[..., D:2 * D].astype(f32), (0, 2, 1))    # [B, 3, N]
    xs = x[..., :2 * D].astype(f32).reshape(B, N, 1, 2 * D)   # [B, N, 1, 6]
    charges_f = charges.astype(f32)                           # [B, N, 1]

    r_ln, canon_tn, slab = _localizer_pallas(xv_cn, seq_tn, seq, xs)

    # node outputs
    R = jnp.transpose(r_ln, (0, 2, 1)).reshape(B, N, 3, 3)
    canon = jnp.transpose(canon_tn, (0, 3, 2, 1)).reshape(B, N, 6 * T)
    rel_feat = jnp.concatenate([canon, charges_f], axis=-1)   # [B, N, 6T+1]

    # edge outputs: single perm + transpose + off-diagonal gather + concat
    # TODO(synk): the static off-diagonal pair gather is left to XLA (data layout
    # plumbing); writing edges directly from the kernel would need pair-in-lanes.
    slab_p = jnp.take(slab, perm, axis=2)                     # rows in final order
    main = jnp.transpose(slab_p, (0, 1, 3, 2)).reshape(B, N * N, Fb)
    main = jnp.take(main, pair_idx, axis=1)                   # [B, E, 9T+4]

    relc = jnp.take(charges_f, send, axis=1) * jnp.take(charges_f, recv, axis=1)
    rel_feat_recv = jnp.take(rel_feat, recv, axis=1)          # [B, E, 6T+1]

    edge_attr = jnp.concatenate([main, relc, rel_feat_recv], axis=-1)
    return rel_feat, R, edge_attr


if __name__ == "__main__":
    key = jax.random.PRNGKey(0)
    B, N, T, D = 2, 5, 8, NUM_DIMS
    k1, k2, k3 = jax.random.split(key, 3)
    sequence = jax.random.normal(k1, (B, N, T, 2 * D), dtype=jnp.float32)
    x = jax.random.normal(k2, (B, N, 2 * D), dtype=jnp.float32)
    charges = jnp.sign(jax.random.normal(k3, (B, N, 1), dtype=jnp.float32))

    fwd = jax.jit(localizer_forward)
    rel_feat, R, edge_attr = fwd(x, charges, sequence)
    jax.block_until_ready((rel_feat, R, edge_attr))

    E = N * (N - 1)
    assert rel_feat.shape == (B, N, 6 * T + 1)
    assert R.shape == (B, N, 3, 3)
    assert edge_attr.shape == (B, E, 15 * T + 6)
    assert bool(jnp.isfinite(rel_feat).all())
    assert bool(jnp.isfinite(R).all())
    assert bool(jnp.isfinite(edge_attr).all())
    print("KERNEL_OK")
</pallas_src>

<mosaic_0001>
module attributes {stable_mosaic.version = 11 : i64} {
  func.func @_localizer_kernel(%arg0: i32, %arg1: i32, %arg2: memref<1x3x5xf32, #tpu.memory_space<vmem>>, %arg3: memref<1x6x8x5xf32, #tpu.memory_space<vmem>>, %arg4: memref<1x1x8x6xf32, #tpu.memory_space<vmem>>, %arg5: memref<1x1x1x6xf32, #tpu.memory_space<vmem>>, %arg6: memref<1x9x5xf32, #tpu.memory_space<vmem>>, %arg7: memref<1x6x8x5xf32, #tpu.memory_space<vmem>>, %arg8: memref<1x1x76x5xf32, #tpu.memory_space<vmem>>) attributes {dimension_semantics = [#tpu.dimension_semantics<parallel>, #tpu.dimension_semantics<arbitrary>], iteration_bounds = array<i64: 2, 5>, scalar_prefetch = 0 : i64, scratch_operands = 0 : i64, tpu.core_type = #tpu.core_type<tc>, window_params = [{transform_indices = @transform_0, window_bounds = array<i64: 1, 3, 5>}, {transform_indices = @transform_1, window_bounds = array<i64: 1, 6, 8, 5>}, {transform_indices = @transform_2, window_bounds = array<i64: 1, 1, 8, 6>}, {transform_indices = @transform_3, window_bounds = array<i64: 1, 1, 1, 6>}, {transform_indices = @transform_4, window_bounds = array<i64: 1, 9, 5>}, {transform_indices = @transform_5, window_bounds = array<i64: 1, 6, 8, 5>}, {transform_indices = @transform_6, window_bounds = array<i64: 1, 1, 76, 5>}]} {
    %c0 = arith.constant 0 : index
    %c0_0 = arith.constant 0 : index
    %c0_1 = arith.constant 0 : index
    %0 = vector.load %arg2[%c0, %c0_0, %c0_1] : memref<1x3x5xf32, #tpu.memory_space<vmem>>, vector<1x3x5xf32>
    %1 = vector.shape_cast %0 : vector<1x3x5xf32> to vector<3x5xf32>
    %2 = vector.extract_strided_slice %1 {offsets = [0, 0], sizes = [1, 5], strides = [1, 1]} : vector<3x5xf32> to vector<1x5xf32>
    %3 = vector.extract_strided_slice %1 {offsets = [1, 0], sizes = [1, 5], strides = [1, 1]} : vector<3x5xf32> to vector<1x5xf32>
    %4 = vector.extract_strided_slice %1 {offsets = [2, 0], sizes = [1, 5], strides = [1, 1]} : vector<3x5xf32> to vector<1x5xf32>
    %5 = arith.mulf %2, %2 : vector<1x5xf32>
    %6 = arith.mulf %3, %3 : vector<1x5xf32>
    %7 = arith.addf %5, %6 : vector<1x5xf32>
    %8 = arith.mulf %4, %4 : vector<1x5xf32>
    %9 = arith.addf %7, %8 : vector<1x5xf32>
    %10 = math.sqrt %9 : vector<1x5xf32>
    %cst = arith.constant 0.000000e+00 : f32
    %11 = vector.broadcast %cst : f32 to vector<1x5xf32>
    %12 = arith.cmpf ogt, %7, %11 : vector<1x5xf32>
    %cst_2 = arith.constant 1.000000e+00 : f32
    %13 = vector.broadcast %cst_2 : f32 to vector<1x5xf32>
    %14 = arith.select %12, %7, %13 : vector<1x5xi1>, vector<1x5xf32>
    %15 = math.rsqrt %14 : vector<1x5xf32>
    %16 = arith.mulf %2, %15 : vector<1x5xf32>
    %cst_3 = arith.constant 1.000000e+00 : f32
    %17 = vector.broadcast %cst_3 : f32 to vector<1x5xf32>
    %18 = arith.select %12, %16, %17 : vector<1x5xi1>, vector<1x5xf32>
    %19 = arith.mulf %3, %15 : vector<1x5xf32>
    %cst_4 = arith.constant 0.000000e+00 : f32
    %20 = vector.broadcast %cst_4 : f32 to vector<1x5xf32>
    %21 = arith.select %12, %19, %20 : vector<1x5xi1>, vector<1x5xf32>
    %cst_5 = arith.constant 1.000000e-07 : f32
    %22 = vector.broadcast %cst_5 : f32 to vector<1x5xf32>
    %23 = arith.addf %10, %22 : vector<1x5xf32>
    %24 = arith.divf %4, %23 : vector<1x5xf32>
    %cst_6 = arith.constant -1.000000e+00 : f32
    %cst_7 = arith.constant 1.000000e+00 : f32
    %25 = vector.broadcast %cst_6 : f32 to vector<1x5xf32>
    %26 = arith.maximumf %25, %24 : vector<1x5xf32>
    %27 = vector.broadcast %cst_7 : f32 to vector<1x5xf32>
    %28 = arith.minimumf %27, %26 : vector<1x5xf32>
    %29 = arith.mulf %28, %28 : vector<1x5xf32>
    %cst_8 = arith.constant 1.000000e+00 : f32
    %30 = vector.broadcast %cst_8 : f32 to vector<1x5xf32>
    %31 = arith.subf %30, %29 : vector<1x5xf32>
    %cst_9 = arith.constant 0.000000e+00 : f32
    %32 = vector.broadcast %cst_9 : f32 to vector<1x5xf32>
    %33 = arith.maximumf %31, %32 : vector<1x5xf32>
    %34 = math.sqrt %33 : vector<1x5xf32>
    %cst_10 = arith.constant 0.000000e+00 : f32
    %35 = vector.broadcast %cst_10 : f32 to vector<1x5xf32>
    %36 = arith.mulf %28, %18 : vector<1x5xf32>
    %cst_11 = arith.constant 0.000000e+00 : f32
    %37 = vector.broadcast %cst_11 : f32 to vector<1x5xf32>
    %38 = arith.subf %37, %21 : vector<1x5xf32>
    %39 = arith.mulf %34, %18 : vector<1x5xf32>
    %40 = arith.mulf %28, %21 : vector<1x5xf32>
    %41 = arith.mulf %34, %21 : vector<1x5xf32>
    %cst_12 = arith.constant 0.000000e+00 : f32
    %42 = vector.broadcast %cst_12 : f32 to vector<1x5xf32>
    %43 = arith.subf %42, %34 : vector<1x5xf32>
    %c0_i32 = arith.constant 0 : i32
    %44 = arith.cmpi eq, %arg1, %c0_i32 : i32
    %45 = arith.extui %44 : i1 to i32
    %c0_i32_13 = arith.constant 0 : i32
    %46 = arith.cmpi ne, %45, %c0_i32_13 : i32
    scf.if %46 {
      %476 = tpu.concatenate %36, %38, %39, %40, %18, %41, %43, %35, %28 in 0 : vector<1x5xf32>, vector<1x5xf32>, vector<1x5xf32>, vector<1x5xf32>, vector<1x5xf32>, vector<1x5xf32>, vector<1x5xf32>, vector<1x5xf32>, vector<1x5xf32> -> vector<9x5xf32>
      %c0_148 = arith.constant 0 : index
      %c0_149 = arith.constant 0 : index
      %c0_150 = arith.constant 0 : index
      %477 = vector.load %arg6[%c0_148, %c0_149, %c0_150] : memref<1x9x5xf32, #tpu.memory_space<vmem>>, vector<1x9x5xf32>
      %478 = vector.shape_cast %477 : vector<1x9x5xf32> to vector<9x5xf32>
      %479 = vector.shape_cast %476 : vector<9x5xf32> to vector<1x9x5xf32>
      tpu.vector_store %arg6[%c0_148, %c0_149, %c0_150], %479 {strides = array<i32>} : memref<1x9x5xf32, #tpu.memory_space<vmem>>, vector<1x9x5xf32>,
      %c0_151 = arith.constant 0 : index
      %c0_152 = arith.constant 0 : index
      %c0_153 = arith.constant 0 : index
      %c0_154 = arith.constant 0 : index
      %480 = vector.load %arg3[%c0_151, %c0_152, %c0_153, %c0_154] : memref<1x6x8x5xf32, #tpu.memory_space<vmem>>, vector<1x1x8x5xf32>
      %481 = vector.shape_cast %480 : vector<1x1x8x5xf32> to vector<8x5xf32>
      %c0_155 = arith.constant 0 : index
      %c1_156 = arith.constant 1 : index
      %c0_157 = arith.constant 0 : index
      %c0_158 = arith.constant 0 : index
      %482 = vector.load %arg3[%c0_155, %c1_156, %c0_157, %c0_158] : memref<1x6x8x5xf32, #tpu.memory_space<vmem>>, vector<1x1x8x5xf32>
      %483 = vector.shape_cast %482 : vector<1x1x8x5xf32> to vector<8x5xf32>
      %c0_159 = arith.constant 0 : index
      %c2_160 = arith.constant 2 : index
      %c0_161 = arith.constant 0 : index
      %c0_162 = arith.constant 0 : index
      %484 = vector.load %arg3[%c0_159, %c2_160, %c0_161, %c0_162] : memref<1x6x8x5xf32, #tpu.memory_space<vmem>>, vector<1x1x8x5xf32>
      %485 = vector.shape_cast %484 : vector<1x1x8x5xf32> to vector<8x5xf32>
      %c0_163 = arith.constant 0 : index
      %c3 = arith.constant 3 : index
      %c0_164 = arith.constant 0 : index
      %c0_165 = arith.constant 0 : index
      %486 = vector.load %arg3[%c0_163, %c3, %c0_164, %c0_165] : memref<1x6x8x5xf32, #tpu.memory_space<vmem>>, vector<1x1x8x5xf32>
      %487 = vector.shape_cast %486 : vector<1x1x8x5xf32> to vector<8x5xf32>
      %c0_166 = arith.constant 0 : index
      %c4 = arith.constant 4 : index
      %c0_167 = arith.constant 0 : index
      %c0_168 = arith.constant 0 : index
      %488 = vector.load %arg3[%c0_166, %c4, %c0_167, %c0_168] : memref<1x6x8x5xf32, #tpu.memory_space<vmem>>, vector<1x1x8x5xf32>
      %489 = vector.shape_cast %488 : vector<1x1x8x5xf32> to vector<8x5xf32>
      %c0_169 = arith.constant 0 : index
      %c5 = arith.constant 5 : index
      %c0_170 = arith.constant 0 : index
      %c0_171 = arith.constant 0 : index
      %490 = vector.load %arg3[%c0_169, %c5, %c0_170, %c0_171] : memref<1x6x8x5xf32, #tpu.memory_space<vmem>>, vector<1x1x8x5xf32>
      %491 = vector.shape_cast %490 : vector<1x1x8x5xf32> to vector<8x5xf32>
      %492 = vector.extract_strided_slice %481 {offsets = [7, 0], sizes = [1, 5], strides = [1, 1]} : vector<8x5xf32> to vector<1x5xf32>
      %493 = vector.broadcast %492 : vector<1x5xf32> to vector<8x5xf32>
      %494 = arith.subf %481, %493 : vector<8x5xf32>
      %495 = vector.extract_strided_slice %483 {offsets = [7, 0], sizes = [1, 5], strides = [1, 1]} : vector<8x5xf32> to vector<1x5xf32>
      %496 = vector.broadcast %495 : vector<1x5xf32> to vector<8x5xf32>
      %497 = arith.subf %483, %496 : vector<8x5xf32>
      %498 = vector.extract_strided_slice %485 {offsets = [7, 0], sizes = [1, 5], strides = [1, 1]} : vector<8x5xf32> to vector<1x5xf32>
      %499 = vector.broadcast %498 : vector<1x5xf32> to vector<8x5xf32>
      %500 = arith.subf %485, %499 : vector<8x5xf32>
      %501 = vector.broadcast %36 : vector<1x5xf32> to vector<8x5xf32>
      %502 = arith.mulf %501, %494 : vector<8x5xf32>
      %503 = vector.broadcast %40 : vector<1x5xf32> to vector<8x5xf32>
      %504 = arith.mulf %503, %497 : vector<8x5xf32>
      %505 = arith.addf %502, %504 : vector<8x5xf32>
      %506 = vector.broadcast %43 : vector<1x5xf32> to vector<8x5xf32>
      %507 = arith.mulf %506, %500 : vector<8x5xf32>
      %508 = arith.addf %505, %507 : vector<8x5xf32>
      %c0_172 = arith.constant 0 : index
      %c0_173 = arith.constant 0 : index
      %c0_174 = arith.constant 0 : index
      %c0_175 = arith.constant 0 : index
      %509 = vector.load %arg7[%c0_172, %c0_173, %c0_174, %c0_175] : memref<1x6x8x5xf32, #tpu.memory_space<vmem>>, vector<1x1x8x5xf32>
      %510 = vector.shape_cast %509 : vector<1x1x8x5xf32> to vector<8x5xf32>
      %511 = vector.shape_cast %508 : vector<8x5xf32> to vector<1x1x8x5xf32>
      tpu.vector_store %arg7[%c0_172, %c0_173, %c0_174, %c0_175], %511 {strides = array<i32>} : memref<1x6x8x5xf32, #tpu.memory_space<vmem>>, vector<1x1x8x5xf32>,
      %512 = vector.broadcast %38 : vector<1x5xf32> to vector<8x5xf32>
      %513 = arith.mulf %512, %494 : vector<8x5xf32>
      %514 = vector.broadcast %18 : vector<1x5xf32> to vector<8x5xf32>
      %515 = arith.mulf %514, %497 : vector<8x5xf32>
      %516 = arith.addf %513, %515 : vector<8x5xf32>
      %517 = vector.broadcast %35 : vector<1x5xf32> to vector<8x5xf32>
      %518 = arith.mulf %517, %500 : vector<8x5xf32>
      %519 = arith.addf %516, %518 : vector<8x5xf32>
      %c0_176 = arith.constant 0 : index
      %c1_177 = arith.constant 1 : index
      %c0_178 = arith.constant 0 : index
      %c0_179 = arith.constant 0 : index
      %520 = vector.load %arg7[%c0_176, %c1_177, %c0_178, %c0_179] : memref<1x6x8x5xf32, #tpu.memory_space<vmem>>, vector<1x1x8x5xf32>
      %521 = vector.shape_cast %520 : vector<1x1x8x5xf32> to vector<8x5xf32>
      %522 = vector.shape_cast %519 : vector<8x5xf32> to vector<1x1x8x5xf32>
      tpu.vector_store %arg7[%c0_176, %c1_177, %c0_178, %c0_179], %522 {strides = array<i32>} : memref<1x6x8x5xf32, #tpu.memory_space<vmem>>, vector<1x1x8x5xf32>,
      %523 = vector.broadcast %39 : vector<1x5xf32> to vector<8x5xf32>
      %524 = arith.mulf %523, %494 : vector<8x5xf32>
      %525 = vector.broadcast %41 : vector<1x5xf32> to vector<8x5xf32>
      %526 = arith.mulf %525, %497 : vector<8x5xf32>
      %527 = arith.addf %524, %526 : vector<8x5xf32>
      %528 = vector.broadcast %28 : vector<1x5xf32> to vector<8x5xf32>
      %529 = arith.mulf %528, %500 : vector<8x5xf32>
      %530 = arith.addf %527, %529 : vector<8x5xf32>
      %c0_180 = arith.constant 0 : index
      %c2_181 = arith.constant 2 : index
      %c0_182 = arith.constant 0 : index
      %c0_183 = arith.constant 0 : index
      %531 = vector.load %arg7[%c0_180, %c2_181, %c0_182, %c0_183] : memref<1x6x8x5xf32, #tpu.memory_space<vmem>>, vector<1x1x8x5xf32>
      %532 = vector.shape_cast %531 : vector<1x1x8x5xf32> to vector<8x5xf32>
      %533 = vector.shape_cast %530 : vector<8x5xf32> to vector<1x1x8x5xf32>
      tpu.vector_store %arg7[%c0_180, %c2_181, %c0_182, %c0_183], %533 {strides = array<i32>} : memref<1x6x8x5xf32, #tpu.memory_space<vmem>>, vector<1x1x8x5xf32>,
      %534 = vector.broadcast %36 : vector<1x5xf32> to vector<8x5xf32>
      %535 = arith.mulf %534, %487 : vector<8x5xf32>
      %536 = vector.broadcast %40 : vector<1x5xf32> to vector<8x5xf32>
      %537 = arith.mulf %536, %489 : vector<8x5xf32>
      %538 = arith.addf %535, %537 : vector<8x5xf32>
      %539 = vector.broadcast %43 : vector<1x5xf32> to vector<8x5xf32>
      %540 = arith.mulf %539, %491 : vector<8x5xf32>
      %541 = arith.addf %538, %540 : vector<8x5xf32>
      %c0_184 = arith.constant 0 : index
      %c3_185 = arith.constant 3 : index
      %c0_186 = arith.constant 0 : index
      %c0_187 = arith.constant 0 : index
      %542 = vector.load %arg7[%c0_184, %c3_185, %c0_186, %c0_187] : memref<1x6x8x5xf32, #tpu.memory_space<vmem>>, vector<1x1x8x5xf32>
      %543 = vector.shape_cast %542 : vector<1x1x8x5xf32> to vector<8x5xf32>
      %544 = vector.shape_cast %541 : vector<8x5xf32> to vector<1x1x8x5xf32>
      tpu.vector_store %arg7[%c0_184, %c3_185, %c0_186, %c0_187], %544 {strides = array<i32>} : memref<1x6x8x5xf32, #tpu.memory_space<vmem>>, vector<1x1x8x5xf32>,
      %545 = vector.broadcast %38 : vector<1x5xf32> to vector<8x5xf32>
      %546 = arith.mulf %545, %487 : vector<8x5xf32>
      %547 = vector.broadcast %18 : vector<1x5xf32> to vector<8x5xf32>
      %548 = arith.mulf %547, %489 : vector<8x5xf32>
      %549 = arith.addf %546, %548 : vector<8x5xf32>
      %550 = vector.broadcast %35 : vector<1x5xf32> to vector<8x5xf32>
      %551 = arith.mulf %550, %491 : vector<8x5xf32>
      %552 = arith.addf %549, %551 : vector<8x5xf32>
      %c0_188 = arith.constant 0 : index
      %c4_189 = arith.constant 4 : index
      %c0_190 = arith.constant 0 : index
      %c0_191 = arith.constant 0 : index
      %553 = vector.load %arg7[%c0_188, %c4_189, %c0_190, %c0_191] : memref<1x6x8x5xf32, #tpu.memory_space<vmem>>, vector<1x1x8x5xf32>
      %554 = vector.shape_cast %553 : vector<1x1x8x5xf32> to vector<8x5xf32>
      %555 = vector.shape_cast %552 : vector<8x5xf32> to vector<1x1x8x5xf32>
      tpu.vector_store %arg7[%c0_188, %c4_189, %c0_190, %c0_191], %555 {strides = array<i32>} : memref<1x6x8x5xf32, #tpu.memory_space<vmem>>, vector<1x1x8x5xf32>,
      %556 = vector.broadcast %39 : vector<1x5xf32> to vector<8x5xf32>
      %557 = arith.mulf %556, %487 : vector<8x5xf32>
      %558 = vector.broadcast %41 : vector<1x5xf32> to vector<8x5xf32>
      %559 = arith.mulf %558, %489 : vector<8x5xf32>
      %560 = arith.addf %557, %559 : vector<8x5xf32>
      %561 = vector.broadcast %28 : vector<1x5xf32> to vector<8x5xf32>
      %562 = arith.mulf %561, %491 : vector<8x5xf32>
      %563 = arith.addf %560, %562 : vector<8x5xf32>
      %c0_192 = arith.constant 0 : index
      %c5_193 = arith.constant 5 : index
      %c0_194 = arith.constant 0 : index
      %c0_195 = arith.constant 0 : index
      %564 = vector.load %arg7[%c0_192, %c5_193, %c0_194, %c0_195] : memref<1x6x8x5xf32, #tpu.memory_space<vmem>>, vector<1x1x8x5xf32>
      %565 = vector.shape_cast %564 : vector<1x1x8x5xf32> to vector<8x5xf32>
      %566 = vector.shape_cast %563 : vector<8x5xf32> to vector<1x1x8x5xf32>
      tpu.vector_store %arg7[%c0_192, %c5_193, %c0_194, %c0_195], %566 {strides = array<i32>} : memref<1x6x8x5xf32, #tpu.memory_space<vmem>>, vector<1x1x8x5xf32>,
    } else {
    }
    %c0_14 = arith.constant 0 : index
    %c0_15 = arith.constant 0 : index
    %c0_16 = arith.constant 0 : index
    %c0_17 = arith.constant 0 : index
    %47 = vector.load %arg4[%c0_14, %c0_15, %c0_16, %c0_17] : memref<1x1x8x6xf32, #tpu.memory_space<vmem>>, vector<1x1x8x6xf32>
    %48 = vector.shape_cast %47 : vector<1x1x8x6xf32> to vector<8x6xf32>
    %49 = vector.extract_strided_slice %48 {offsets = [0, 0], sizes = [8, 1], strides = [1, 1]} : vector<8x6xf32> to vector<8x1xf32>
    %50 = vector.extract_strided_slice %48 {offsets = [0, 1], sizes = [8, 1], strides = [1, 1]} : vector<8x6xf32> to vector<8x1xf32>
    %51 = vector.extract_strided_slice %48 {offsets = [0, 2], sizes = [8, 1], strides = [1, 1]} : vector<8x6xf32> to vector<8x1xf32>
    %52 = vector.extract_strided_slice %48 {offsets = [0, 3], sizes = [8, 1], strides = [1, 1]} : vector<8x6xf32> to vector<8x1xf32>
    %53 = vector.extract_strided_slice %48 {offsets = [0, 4], sizes = [8, 1], strides = [1, 1]} : vector<8x6xf32> to vector<8x1xf32>
    %54 = vector.extract_strided_slice %48 {offsets = [0, 5], sizes = [8, 1], strides = [1, 1]} : vector<8x6xf32> to vector<8x1xf32>
    %c0_18 = arith.constant 0 : index
    %c0_19 = arith.constant 0 : index
    %c0_20 = arith.constant 0 : index
    %c0_21 = arith.constant 0 : index
    %55 = vector.load %arg5[%c0_18, %c0_19, %c0_20, %c0_21] : memref<1x1x1x6xf32, #tpu.memory_space<vmem>>, vector<1x1x1x6xf32>
    %56 = vector.shape_cast %55 : vector<1x1x1x6xf32> to vector<1x6xf32>
    %57 = vector.extract_strided_slice %56 {offsets = [0, 3], sizes = [1, 1], strides = [1, 1]} : vector<1x6xf32> to vector<1x1xf32>
    %58 = vector.extract_strided_slice %56 {offsets = [0, 4], sizes = [1, 1], strides = [1, 1]} : vector<1x6xf32> to vector<1x1xf32>
    %59 = vector.extract_strided_slice %56 {offsets = [0, 5], sizes = [1, 1], strides = [1, 1]} : vector<1x6xf32> to vector<1x1xf32>
    %60 = arith.mulf %57, %57 : vector<1x1xf32>
    %61 = arith.mulf %58, %58 : vector<1x1xf32>
    %62 = arith.addf %60, %61 : vector<1x1xf32>
    %63 = arith.mulf %59, %59 : vector<1x1xf32>
    %64 = arith.addf %62, %63 : vector<1x1xf32>
    %65 = math.sqrt %64 : vector<1x1xf32>
    %cst_22 = arith.constant 0.000000e+00 : f32
    %66 = vector.broadcast %cst_22 : f32 to vector<1x1xf32>
    %67 = arith.cmpf ogt, %62, %66 : vector<1x1xf32>
    %cst_23 = arith.constant 1.000000e+00 : f32
    %68 = vector.broadcast %cst_23 : f32 to vector<1x1xf32>
    %69 = arith.select %67, %62, %68 : vector<1x1xi1>, vector<1x1xf32>
    %70 = math.rsqrt %69 : vector<1x1xf32>
    %71 = arith.mulf %57, %70 : vector<1x1xf32>
    %cst_24 = arith.constant 1.000000e+00 : f32
    %72 = vector.broadcast %cst_24 : f32 to vector<1x1xf32>
    %73 = arith.select %67, %71, %72 : vector<1x1xi1>, vector<1x1xf32>
    %74 = arith.mulf %58, %70 : vector<1x1xf32>
    %cst_25 = arith.constant 0.000000e+00 : f32
    %75 = vector.broadcast %cst_25 : f32 to vector<1x1xf32>
    %76 = arith.select %67, %74, %75 : vector<1x1xi1>, vector<1x1xf32>
    %cst_26 = arith.constant 1.000000e-07 : f32
    %77 = vector.broadcast %cst_26 : f32 to vector<1x1xf32>
    %78 = arith.addf %65, %77 : vector<1x1xf32>
    %79 = arith.divf %59, %78 : vector<1x1xf32>
    %cst_27 = arith.constant -1.000000e+00 : f32
    %cst_28 = arith.constant 1.000000e+00 : f32
    %80 = vector.broadcast %cst_27 : f32 to vector<1x1xf32>
    %81 = arith.maximumf %80, %79 : vector<1x1xf32>
    %82 = vector.broadcast %cst_28 : f32 to vector<1x1xf32>
    %83 = arith.minimumf %82, %81 : vector<1x1xf32>
    %84 = arith.mulf %83, %83 : vector<1x1xf32>
    %cst_29 = arith.constant 1.000000e+00 : f32
    %85 = vector.broadcast %cst_29 : f32 to vector<1x1xf32>
    %86 = arith.subf %85, %84 : vector<1x1xf32>
    %cst_30 = arith.constant 0.000000e+00 : f32
    %87 = vector.broadcast %cst_30 : f32 to vector<1x1xf32>
    %88 = arith.maximumf %86, %87 : vector<1x1xf32>
    %89 = math.sqrt %88 : vector<1x1xf32>
    %cst_31 = arith.constant 0.000000e+00 : f32
    %90 = vector.broadcast %cst_31 : f32 to vector<1x1xf32>
    %91 = arith.mulf %83, %73 : vector<1x1xf32>
    %cst_32 = arith.constant 0.000000e+00 : f32
    %92 = vector.broadcast %cst_32 : f32 to vector<1x1xf32>
    %93 = arith.subf %92, %76 : vector<1x1xf32>
    %94 = arith.mulf %89, %73 : vector<1x1xf32>
    %95 = arith.mulf %83, %76 : vector<1x1xf32>
    %96 = arith.mulf %89, %76 : vector<1x1xf32>
    %cst_33 = arith.constant 0.000000e+00 : f32
    %97 = vector.broadcast %cst_33 : f32 to vector<1x1xf32>
    %98 = arith.subf %97, %89 : vector<1x1xf32>
    %c0_34 = arith.constant 0 : index
    %c0_35 = arith.constant 0 : index
    %c7 = arith.constant 7 : index
    %c0_36 = arith.constant 0 : index
    %99 = vector.load %arg3[%c0_34, %c0_35, %c7, %c0_36] : memref<1x6x8x5xf32, #tpu.memory_space<vmem>>, vector<1x1x1x5xf32>
    %100 = vector.shape_cast %99 : vector<1x1x1x5xf32> to vector<1x5xf32>
    %c0_37 = arith.constant 0 : index
    %c1 = arith.constant 1 : index
    %c7_38 = arith.constant 7 : index
    %c0_39 = arith.constant 0 : index
    %101 = vector.load %arg3[%c0_37, %c1, %c7_38, %c0_39] : memref<1x6x8x5xf32, #tpu.memory_space<vmem>>, vector<1x1x1x5xf32>
    %102 = vector.shape_cast %101 : vector<1x1x1x5xf32> to vector<1x5xf32>
    %c0_40 = arith.constant 0 : index
    %c2 = arith.constant 2 : index
    %c7_41 = arith.constant 7 : index
    %c0_42 = arith.constant 0 : index
    %103 = vector.load %arg3[%c0_40, %c2, %c7_41, %c0_42] : memref<1x6x8x5xf32, #tpu.memory_space<vmem>>, vector<1x1x1x5xf32>
    %104 = vector.shape_cast %103 : vector<1x1x1x5xf32> to vector<1x5xf32>
    %105 = vector.broadcast %49 : vector<8x1xf32> to vector<8x5xf32>
    %106 = vector.broadcast %100 : vector<1x5xf32> to vector<8x5xf32>
    %107 = arith.subf %105, %106 : vector<8x5xf32>
    %108 = vector.broadcast %50 : vector<8x1xf32> to vector<8x5xf32>
    %109 = vector.broadcast %102 : vector<1x5xf32> to vector<8x5xf32>
    %110 = arith.subf %108, %109 : vector<8x5xf32>
    %111 = vector.broadcast %51 : vector<8x1xf32> to vector<8x5xf32>
    %112 = vector.broadcast %104 : vector<1x5xf32> to vector<8x5xf32>
    %113 = arith.subf %111, %112 : vector<8x5xf32>
    %114 = arith.mulf %107, %107 : vector<8x5xf32>
    %115 = arith.mulf %110, %110 : vector<8x5xf32>
    %116 = arith.addf %114, %115 : vector<8x5xf32>
    %117 = arith.mulf %113, %113 : vector<8x5xf32>
    %118 = arith.addf %116, %117 : vector<8x5xf32>
    %119 = math.sqrt %118 : vector<8x5xf32>
    %120 = vector.broadcast %36 : vector<1x5xf32> to vector<8x5xf32>
    %121 = arith.mulf %120, %107 : vector<8x5xf32>
    %122 = vector.broadcast %40 : vector<1x5xf32> to vector<8x5xf32>
    %123 = arith.mulf %122, %110 : vector<8x5xf32>
    %124 = arith.addf %121, %123 : vector<8x5xf32>
    %125 = vector.broadcast %43 : vector<1x5xf32> to vector<8x5xf32>
    %126 = arith.mulf %125, %113 : vector<8x5xf32>
    %127 = arith.addf %124, %126 : vector<8x5xf32>
    %128 = vector.broadcast %38 : vector<1x5xf32> to vector<8x5xf32>
    %129 = arith.mulf %128, %107 : vector<8x5xf32>
    %130 = vector.broadcast %18 : vector<1x5xf32> to vector<8x5xf32>
    %131 = arith.mulf %130, %110 : vector<8x5xf32>
    %132 = arith.addf %129, %131 : vector<8x5xf32>
    %133 = vector.broadcast %35 : vector<1x5xf32> to vector<8x5xf32>
    %134 = arith.mulf %133, %113 : vector<8x5xf32>
    %135 = arith.addf %132, %134 : vector<8x5xf32>
    %136 = vector.broadcast %39 : vector<1x5xf32> to vector<8x5xf32>
    %137 = arith.mulf %136, %107 : vector<8x5xf32>
    %138 = vector.broadcast %41 : vector<1x5xf32> to vector<8x5xf32>
    %139 = arith.mulf %138, %110 : vector<8x5xf32>
    %140 = arith.addf %137, %139 : vector<8x5xf32>
    %141 = vector.broadcast %28 : vector<1x5xf32> to vector<8x5xf32>
    %142 = arith.mulf %141, %113 : vector<8x5xf32>
    %143 = arith.addf %140, %142 : vector<8x5xf32>
    %cst_43 = arith.constant 0.000000e+00 : f32
    %144 = vector.broadcast %cst_43 : f32 to vector<8x5xf32>
    %145 = arith.cmpf oeq, %127, %144 : vector<8x5xf32>
    %cst_44 = arith.constant 1.000000e+00 : f32
    %146 = vector.broadcast %cst_44 : f32 to vector<8x5xf32>
    %147 = arith.select %145, %146, %127 : vector<8x5xi1>, vector<8x5xf32>
    %148 = arith.divf %135, %147 : vector<8x5xf32>
    %cst_45 = arith.constant 0.000000e+00 : f32
    %149 = vector.broadcast %cst_45 : f32 to vector<8x5xf32>
    %150 = arith.cmpf olt, %148, %149 : vector<8x5xf32>
    %cst_46 = arith.constant -1.000000e+00 : f32
    %cst_47 = arith.constant 1.000000e+00 : f32
    %151 = vector.broadcast %cst_46 : f32 to vector<8x5xf32>
    %152 = vector.broadcast %cst_47 : f32 to vector<8x5xf32>
    %153 = arith.select %150, %151, %152 : vector<8x5xi1>, vector<8x5xf32>
    %154 = math.absf %148 : vector<8x5xf32>
    %cst_48 = arith.constant 2.41421366 : f32
    %155 = vector.broadcast %cst_48 : f32 to vector<8x5xf32>
    %156 = arith.cmpf ogt, %154, %155 : vector<8x5xf32>
    %cst_49 = arith.constant 0.414213568 : f32
    %157 = vector.broadcast %cst_49 : f32 to vector<8x5xf32>
    %158 = arith.cmpf ogt, %154, %157 : vector<8x5xf32>
    %cst_50 = arith.constant 1.000000e+00 : f32
    %159 = vector.broadcast %cst_50 : f32 to vector<8x5xf32>
    %160 = arith.maximumf %154, %159 : vector<8x5xf32>
    %cst_51 = arith.constant -1.000000e+00 : f32
    %161 = vector.broadcast %cst_51 : f32 to vector<8x5xf32>
    %162 = arith.divf %161, %160 : vector<8x5xf32>
    %cst_52 = arith.constant 1.000000e+00 : f32
    %163 = vector.broadcast %cst_52 : f32 to vector<8x5xf32>
    %164 = arith.subf %154, %163 : vector<8x5xf32>
    %cst_53 = arith.constant 1.000000e+00 : f32
    %165 = vector.broadcast %cst_53 : f32 to vector<8x5xf32>
    %166 = arith.addf %154, %165 : vector<8x5xf32>
    %167 = arith.divf %164, %166 : vector<8x5xf32>
    %168 = arith.select %158, %167, %154 : vector<8x5xi1>, vector<8x5xf32>
    %169 = arith.select %156, %162, %168 : vector<8x5xi1>, vector<8x5xf32>
    %cst_54 = arith.constant 0.785398185 : f32
    %cst_55 = arith.constant 0.000000e+00 : f32
    %170 = vector.broadcast %cst_54 : f32 to vector<8x5xf32>
    %171 = vector.broadcast %cst_55 : f32 to vector<8x5xf32>
    %172 = arith.select %158, %170, %171 : vector<8x5xi1>, vector<8x5xf32>
    %cst_56 = arith.constant 1.57079637 : f32
    %173 = vector.broadcast %cst_56 : f32 to vector<8x5xf32>
    %174 = arith.select %156, %173, %172 : vector<8x5xi1>, vector<8x5xf32>
    %175 = arith.mulf %169, %169 : vector<8x5xf32>
    %cst_57 = arith.constant 0.0805374458 : f32
    %176 = vector.broadcast %cst_57 : f32 to vector<8x5xf32>
    %177 = arith.mulf %176, %175 : vector<8x5xf32>
    %cst_58 = arith.constant 0.138776854 : f32
    %178 = vector.broadcast %cst_58 : f32 to vector<8x5xf32>
    %179 = arith.subf %177, %178 : vector<8x5xf32>
    %180 = arith.mulf %179, %175 : vector<8x5xf32>
    %cst_59 = arith.constant 0.199777111 : f32
    %181 = vector.broadcast %cst_59 : f32 to vector<8x5xf32>
    %182 = arith.addf %180, %181 : vector<8x5xf32>
    %183 = arith.mulf %182, %175 : vector<8x5xf32>
    %cst_60 = arith.constant 0.333329499 : f32
    %184 = vector.broadcast %cst_60 : f32 to vector<8x5xf32>
    %185 = arith.subf %183, %184 : vector<8x5xf32>
    %186 = arith.mulf %185, %175 : vector<8x5xf32>
    %187 = arith.mulf %186, %169 : vector<8x5xf32>
    %188 = arith.addf %187, %169 : vector<8x5xf32>
    %189 = arith.addf %174, %188 : vector<8x5xf32>
    %190 = arith.mulf %153, %189 : vector<8x5xf32>
    %cst_61 = arith.constant 0.000000e+00 : f32
    %191 = vector.broadcast %cst_61 : f32 to vector<8x5xf32>
    %192 = arith.cmpf olt, %127, %191 : vector<8x5xf32>
    %cst_62 = arith.constant 0.000000e+00 : f32
    %193 = vector.broadcast %cst_62 : f32 to vector<8x5xf32>
    %194 = arith.cmpf oge, %135, %193 : vector<8x5xf32>
    %cst_63 = arith.constant 3.14159274 : f32
    %195 = vector.broadcast %cst_63 : f32 to vector<8x5xf32>
    %196 = arith.addf %190, %195 : vector<8x5xf32>
    %cst_64 = arith.constant 3.14159274 : f32
    %197 = vector.broadcast %cst_64 : f32 to vector<8x5xf32>
    %198 = arith.subf %190, %197 : vector<8x5xf32>
    %199 = arith.select %194, %196, %198 : vector<8x5xi1>, vector<8x5xf32>
    %200 = arith.select %192, %199, %190 : vector<8x5xi1>, vector<8x5xf32>
    %cst_65 = arith.constant 0.000000e+00 : f32
    %201 = vector.broadcast %cst_65 : f32 to vector<8x5xf32>
    %202 = arith.cmpf oeq, %127, %201 : vector<8x5xf32>
    %cst_66 = arith.constant 0.000000e+00 : f32
    %203 = vector.broadcast %cst_66 : f32 to vector<8x5xf32>
    %204 = arith.cmpf ogt, %135, %203 : vector<8x5xf32>
    %cst_67 = arith.constant 0.000000e+00 : f32
    %205 = vector.broadcast %cst_67 : f32 to vector<8x5xf32>
    %206 = arith.cmpf olt, %135, %205 : vector<8x5xf32>
    %cst_68 = arith.constant -1.57079637 : f32
    %cst_69 = arith.constant 0.000000e+00 : f32
    %207 = vector.broadcast %cst_68 : f32 to vector<8x5xf32>
    %208 = vector.broadcast %cst_69 : f32 to vector<8x5xf32>
    %209 = arith.select %206, %207, %208 : vector<8x5xi1>, vector<8x5xf32>
    %cst_70 = arith.constant 1.57079637 : f32
    %210 = vector.broadcast %cst_70 : f32 to vector<8x5xf32>
    %211 = arith.select %204, %210, %209 : vector<8x5xi1>, vector<8x5xf32>
    %212 = arith.select %202, %211, %200 : vector<8x5xi1>, vector<8x5xf32>
    %213 = arith.mulf %127, %127 : vector<8x5xf32>
    %214 = arith.mulf %135, %135 : vector<8x5xf32>
    %215 = arith.addf %213, %214 : vector<8x5xf32>
    %216 = math.sqrt %215 : vector<8x5xf32>
    %cst_71 = arith.constant 0.000000e+00 : f32
    %217 = vector.broadcast %cst_71 : f32 to vector<8x5xf32>
    %218 = arith.cmpf oeq, %143, %217 : vector<8x5xf32>
    %cst_72 = arith.constant 1.000000e+00 : f32
    %219 = vector.broadcast %cst_72 : f32 to vector<8x5xf32>
    %220 = arith.select %218, %219, %143 : vector<8x5xi1>, vector<8x5xf32>
    %221 = arith.divf %216, %220 : vector<8x5xf32>
    %cst_73 = arith.constant 0.000000e+00 : f32
    %222 = vector.broadcast %cst_73 : f32 to vector<8x5xf32>
    %223 = arith.cmpf olt, %221, %222 : vector<8x5xf32>
    %cst_74 = arith.constant -1.000000e+00 : f32
    %cst_75 = arith.constant 1.000000e+00 : f32
    %224 = vector.broadcast %cst_74 : f32 to vector<8x5xf32>
    %225 = vector.broadcast %cst_75 : f32 to vector<8x5xf32>
    %226 = arith.select %223, %224, %225 : vector<8x5xi1>, vector<8x5xf32>
    %227 = math.absf %221 : vector<8x5xf32>
    %cst_76 = arith.constant 2.41421366 : f32
    %228 = vector.broadcast %cst_76 : f32 to vector<8x5xf32>
    %229 = arith.cmpf ogt, %227, %228 : vector<8x5xf32>
    %cst_77 = arith.constant 0.414213568 : f32
    %230 = vector.broadcast %cst_77 : f32 to vector<8x5xf32>
    %231 = arith.cmpf ogt, %227, %230 : vector<8x5xf32>
    %cst_78 = arith.constant 1.000000e+00 : f32
    %232 = vector.broadcast %cst_78 : f32 to vector<8x5xf32>
    %233 = arith.maximumf %227, %232 : vector<8x5xf32>
    %cst_79 = arith.constant -1.000000e+00 : f32
    %234 = vector.broadcast %cst_79 : f32 to vector<8x5xf32>
    %235 = arith.divf %234, %233 : vector<8x5xf32>
    %cst_80 = arith.constant 1.000000e+00 : f32
    %236 = vector.broadcast %cst_80 : f32 to vector<8x5xf32>
    %237 = arith.subf %227, %236 : vector<8x5xf32>
    %cst_81 = arith.constant 1.000000e+00 : f32
    %238 = vector.broadcast %cst_81 : f32 to vector<8x5xf32>
    %239 = arith.addf %227, %238 : vector<8x5xf32>
    %240 = arith.divf %237, %239 : vector<8x5xf32>
    %241 = arith.select %231, %240, %227 : vector<8x5xi1>, vector<8x5xf32>
    %242 = arith.select %229, %235, %241 : vector<8x5xi1>, vector<8x5xf32>
    %cst_82 = arith.constant 0.785398185 : f32
    %cst_83 = arith.constant 0.000000e+00 : f32
    %243 = vector.broadcast %cst_82 : f32 to vector<8x5xf32>
    %244 = vector.broadcast %cst_83 : f32 to vector<8x5xf32>
    %245 = arith.select %231, %243, %244 : vector<8x5xi1>, vector<8x5xf32>
    %cst_84 = arith.constant 1.57079637 : f32
    %246 = vector.broadcast %cst_84 : f32 to vector<8x5xf32>
    %247 = arith.select %229, %246, %245 : vector<8x5xi1>, vector<8x5xf32>
    %248 = arith.mulf %242, %242 : vector<8x5xf32>
    %cst_85 = arith.constant 0.0805374458 : f32
    %249 = vector.broadcast %cst_85 : f32 to vector<8x5xf32>
    %250 = arith.mulf %249, %248 : vector<8x5xf32>
    %cst_86 = arith.constant 0.138776854 : f32
    %251 = vector.broadcast %cst_86 : f32 to vector<8x5xf32>
    %252 = arith.subf %250, %251 : vector<8x5xf32>
    %253 = arith.mulf %252, %248 : vector<8x5xf32>
    %cst_87 = arith.constant 0.199777111 : f32
    %254 = vector.broadcast %cst_87 : f32 to vector<8x5xf32>
    %255 = arith.addf %253, %254 : vector<8x5xf32>
    %256 = arith.mulf %255, %248 : vector<8x5xf32>
    %cst_88 = arith.constant 0.333329499 : f32
    %257 = vector.broadcast %cst_88 : f32 to vector<8x5xf32>
    %258 = arith.subf %256, %257 : vector<8x5xf32>
    %259 = arith.mulf %258, %248 : vector<8x5xf32>
    %260 = arith.mulf %259, %242 : vector<8x5xf32>
    %261 = arith.addf %260, %242 : vector<8x5xf32>
    %262 = arith.addf %247, %261 : vector<8x5xf32>
    %263 = arith.mulf %226, %262 : vector<8x5xf32>
    %cst_89 = arith.constant 0.000000e+00 : f32
    %264 = vector.broadcast %cst_89 : f32 to vector<8x5xf32>
    %265 = arith.cmpf olt, %143, %264 : vector<8x5xf32>
    %cst_90 = arith.constant 0.000000e+00 : f32
    %266 = vector.broadcast %cst_90 : f32 to vector<8x5xf32>
    %267 = arith.cmpf oge, %216, %266 : vector<8x5xf32>
    %cst_91 = arith.constant 3.14159274 : f32
    %268 = vector.broadcast %cst_91 : f32 to vector<8x5xf32>
    %269 = arith.addf %263, %268 : vector<8x5xf32>
    %cst_92 = arith.constant 3.14159274 : f32
    %270 = vector.broadcast %cst_92 : f32 to vector<8x5xf32>
    %271 = arith.subf %263, %270 : vector<8x5xf32>
    %272 = arith.select %267, %269, %271 : vector<8x5xi1>, vector<8x5xf32>
    %273 = arith.select %265, %272, %263 : vector<8x5xi1>, vector<8x5xf32>
    %cst_93 = arith.constant 0.000000e+00 : f32
    %274 = vector.broadcast %cst_93 : f32 to vector<8x5xf32>
    %275 = arith.cmpf oeq, %143, %274 : vector<8x5xf32>
    %cst_94 = arith.constant 0.000000e+00 : f32
    %276 = vector.broadcast %cst_94 : f32 to vector<8x5xf32>
    %277 = arith.cmpf ogt, %216, %276 : vector<8x5xf32>
    %cst_95 = arith.constant 0.000000e+00 : f32
    %278 = vector.broadcast %cst_95 : f32 to vector<8x5xf32>
    %279 = arith.cmpf olt, %216, %278 : vector<8x5xf32>
    %cst_96 = arith.constant -1.57079637 : f32
    %cst_97 = arith.constant 0.000000e+00 : f32
    %280 = vector.broadcast %cst_96 : f32 to vector<8x5xf32>
    %281 = vector.broadcast %cst_97 : f32 to vector<8x5xf32>
    %282 = arith.select %279, %280, %281 : vector<8x5xi1>, vector<8x5xf32>
    %cst_98 = arith.constant 1.57079637 : f32
    %283 = vector.broadcast %cst_98 : f32 to vector<8x5xf32>
    %284 = arith.select %277, %283, %282 : vector<8x5xi1>, vector<8x5xf32>
    %285 = arith.select %275, %284, %273 : vector<8x5xi1>, vector<8x5xf32>
    %286 = vector.broadcast %36 : vector<1x5xf32> to vector<8x5xf32>
    %287 = vector.broadcast %52 : vector<8x1xf32> to vector<8x5xf32>
    %288 = arith.mulf %286, %287 : vector<8x5xf32>
    %289 = vector.broadcast %40 : vector<1x5xf32> to vector<8x5xf32>
    %290 = vector.broadcast %53 : vector<8x1xf32> to vector<8x5xf32>
    %291 = arith.mulf %289, %290 : vector<8x5xf32>
    %292 = arith.addf %288, %291 : vector<8x5xf32>
    %293 = vector.broadcast %43 : vector<1x5xf32> to vector<8x5xf32>
    %294 = vector.broadcast %54 : vector<8x1xf32> to vector<8x5xf32>
    %295 = arith.mulf %293, %294 : vector<8x5xf32>
    %296 = arith.addf %292, %295 : vector<8x5xf32>
    %297 = vector.broadcast %38 : vector<1x5xf32> to vector<8x5xf32>
    %298 = vector.broadcast %52 : vector<8x1xf32> to vector<8x5xf32>
    %299 = arith.mulf %297, %298 : vector<8x5xf32>
    %300 = vector.broadcast %18 : vector<1x5xf32> to vector<8x5xf32>
    %301 = vector.broadcast %53 : vector<8x1xf32> to vector<8x5xf32>
    %302 = arith.mulf %300, %301 : vector<8x5xf32>
    %303 = arith.addf %299, %302 : vector<8x5xf32>
    %304 = vector.broadcast %35 : vector<1x5xf32> to vector<8x5xf32>
    %305 = vector.broadcast %54 : vector<8x1xf32> to vector<8x5xf32>
    %306 = arith.mulf %304, %305 : vector<8x5xf32>
    %307 = arith.addf %303, %306 : vector<8x5xf32>
    %308 = vector.broadcast %39 : vector<1x5xf32> to vector<8x5xf32>
    %309 = vector.broadcast %52 : vector<8x1xf32> to vector<8x5xf32>
    %310 = arith.mulf %308, %309 : vector<8x5xf32>
    %311 = vector.broadcast %41 : vector<1x5xf32> to vector<8x5xf32>
    %312 = vector.broadcast %53 : vector<8x1xf32> to vector<8x5xf32>
    %313 = arith.mulf %311, %312 : vector<8x5xf32>
    %314 = arith.addf %310, %313 : vector<8x5xf32>
    %315 = vector.broadcast %28 : vector<1x5xf32> to vector<8x5xf32>
    %316 = vector.broadcast %54 : vector<8x1xf32> to vector<8x5xf32>
    %317 = arith.mulf %315, %316 : vector<8x5xf32>
    %318 = arith.addf %314, %317 : vector<8x5xf32>
    %319 = vector.broadcast %91 : vector<1x1xf32> to vector<1x5xf32>
    %320 = arith.mulf %36, %319 : vector<1x5xf32>
    %321 = vector.broadcast %95 : vector<1x1xf32> to vector<1x5xf32>
    %322 = arith.mulf %40, %321 : vector<1x5xf32>
    %323 = arith.addf %320, %322 : vector<1x5xf32>
    %324 = vector.broadcast %98 : vector<1x1xf32> to vector<1x5xf32>
    %325 = arith.mulf %43, %324 : vector<1x5xf32>
    %326 = arith.addf %323, %325 : vector<1x5xf32>
    %327 = vector.broadcast %93 : vector<1x1xf32> to vector<1x5xf32>
    %328 = arith.mulf %38, %327 : vector<1x5xf32>
    %329 = vector.broadcast %73 : vector<1x1xf32> to vector<1x5xf32>
    %330 = arith.mulf %18, %329 : vector<1x5xf32>
    %331 = arith.addf %328, %330 : vector<1x5xf32>
    %332 = vector.broadcast %90 : vector<1x1xf32> to vector<1x5xf32>
    %333 = arith.mulf %35, %332 : vector<1x5xf32>
    %334 = arith.addf %331, %333 : vector<1x5xf32>
    %335 = vector.broadcast %94 : vector<1x1xf32> to vector<1x5xf32>
    %336 = arith.mulf %39, %335 : vector<1x5xf32>
    %337 = vector.broadcast %96 : vector<1x1xf32> to vector<1x5xf32>
    %338 = arith.mulf %41, %337 : vector<1x5xf32>
    %339 = arith.addf %336, %338 : vector<1x5xf32>
    %340 = vector.broadcast %83 : vector<1x1xf32> to vector<1x5xf32>
    %341 = arith.mulf %28, %340 : vector<1x5xf32>
    %342 = arith.addf %339, %341 : vector<1x5xf32>
    %cst_99 = arith.constant 1.000000e+00 : f32
    %343 = vector.broadcast %cst_99 : f32 to vector<1x5xf32>
    %344 = arith.addf %343, %326 : vector<1x5xf32>
    %345 = arith.addf %344, %334 : vector<1x5xf32>
    %346 = arith.addf %345, %342 : vector<1x5xf32>
    %cst_100 = arith.constant 9.99999993E-9 : f32
    %347 = vector.broadcast %cst_100 : f32 to vector<1x5xf32>
    %348 = arith.maximumf %346, %347 : vector<1x5xf32>
    %349 = math.sqrt %348 : vector<1x5xf32>
    %cst_101 = arith.constant 5.000000e-01 : f32
    %350 = vector.broadcast %cst_101 : f32 to vector<1x5xf32>
    %351 = arith.mulf %349, %350 : vector<1x5xf32>
    %cst_102 = arith.constant 1.000000e+00 : f32
    %352 = vector.broadcast %cst_102 : f32 to vector<1x5xf32>
    %353 = arith.addf %352, %326 : vector<1x5xf32>
    %354 = arith.subf %353, %334 : vector<1x5xf32>
    %355 = arith.subf %354, %342 : vector<1x5xf32>
    %cst_103 = arith.constant 9.99999993E-9 : f32
    %356 = vector.broadcast %cst_103 : f32 to vector<1x5xf32>
    %357 = arith.maximumf %355, %356 : vector<1x5xf32>
    %358 = math.sqrt %357 : vector<1x5xf32>
    %cst_104 = arith.constant 5.000000e-01 : f32
    %359 = vector.broadcast %cst_104 : f32 to vector<1x5xf32>
    %360 = arith.mulf %358, %359 : vector<1x5xf32>
    %cst_105 = arith.constant 1.000000e+00 : f32
    %361 = vector.broadcast %cst_105 : f32 to vector<1x5xf32>
    %362 = arith.subf %361, %326 : vector<1x5xf32>
    %363 = arith.addf %362, %334 : vector<1x5xf32>
    %364 = arith.subf %363, %342 : vector<1x5xf32>
    %cst_106 = arith.constant 9.99999993E-9 : f32
    %365 = vector.broadcast %cst_106 : f32 to vector<1x5xf32>
    %366 = arith.maximumf %364, %365 : vector<1x5xf32>
    %367 = math.sqrt %366 : vector<1x5xf32>
    %cst_107 = arith.constant 5.000000e-01 : f32
    %368 = vector.broadcast %cst_107 : f32 to vector<1x5xf32>
    %369 = arith.mulf %367, %368 : vector<1x5xf32>
    %cst_108 = arith.constant 1.000000e+00 : f32
    %370 = vector.broadcast %cst_108 : f32 to vector<1x5xf32>
    %371 = arith.subf %370, %326 : vector<1x5xf32>
    %372 = arith.subf %371, %334 : vector<1x5xf32>
    %373 = arith.addf %372, %342 : vector<1x5xf32>
    %cst_109 = arith.constant 9.99999993E-9 : f32
    %374 = vector.broadcast %cst_109 : f32 to vector<1x5xf32>
    %375 = arith.maximumf %373, %374 : vector<1x5xf32>
    %376 = math.sqrt %375 : vector<1x5xf32>
    %cst_110 = arith.constant 5.000000e-01 : f32
    %377 = vector.broadcast %cst_110 : f32 to vector<1x5xf32>
    %378 = arith.mulf %376, %377 : vector<1x5xf32>
    %379 = vector.broadcast %93 : vector<1x1xf32> to vector<1x5xf32>
    %380 = arith.mulf %39, %379 : vector<1x5xf32>
    %381 = vector.broadcast %73 : vector<1x1xf32> to vector<1x5xf32>
    %382 = arith.mulf %41, %381 : vector<1x5xf32>
    %383 = arith.addf %380, %382 : vector<1x5xf32>
    %384 = vector.broadcast %90 : vector<1x1xf32> to vector<1x5xf32>
    %385 = arith.mulf %28, %384 : vector<1x5xf32>
    %386 = arith.addf %383, %385 : vector<1x5xf32>
    %387 = vector.broadcast %94 : vector<1x1xf32> to vector<1x5xf32>
    %388 = arith.mulf %38, %387 : vector<1x5xf32>
    %389 = vector.broadcast %96 : vector<1x1xf32> to vector<1x5xf32>
    %390 = arith.mulf %18, %389 : vector<1x5xf32>
    %391 = arith.addf %388, %390 : vector<1x5xf32>
    %392 = vector.broadcast %83 : vector<1x1xf32> to vector<1x5xf32>
    %393 = arith.mulf %35, %392 : vector<1x5xf32>
    %394 = arith.addf %391, %393 : vector<1x5xf32>
    %395 = arith.subf %386, %394 : vector<1x5xf32>
    %cst_111 = arith.constant 0.000000e+00 : f32
    %396 = vector.broadcast %cst_111 : f32 to vector<1x5xf32>
    %397 = arith.cmpf olt, %395, %396 : vector<1x5xf32>
    %cst_112 = arith.constant 0.000000e+00 : f32
    %398 = vector.broadcast %cst_112 : f32 to vector<1x5xf32>
    %399 = arith.subf %398, %360 : vector<1x5xf32>
    %400 = arith.select %397, %399, %360 : vector<1x5xi1>, vector<1x5xf32>
    %401 = vector.broadcast %94 : vector<1x1xf32> to vector<1x5xf32>
    %402 = arith.mulf %36, %401 : vector<1x5xf32>
    %403 = vector.broadcast %96 : vector<1x1xf32> to vector<1x5xf32>
    %404 = arith.mulf %40, %403 : vector<1x5xf32>
    %405 = arith.addf %402, %404 : vector<1x5xf32>
    %406 = vector.broadcast %83 : vector<1x1xf32> to vector<1x5xf32>
    %407 = arith.mulf %43, %406 : vector<1x5xf32>
    %408 = arith.addf %405, %407 : vector<1x5xf32>
    %409 = vector.broadcast %91 : vector<1x1xf32> to vector<1x5xf32>
    %410 = arith.mulf %39, %409 : vector<1x5xf32>
    %411 = vector.broadcast %95 : vector<1x1xf32> to vector<1x5xf32>
    %412 = arith.mulf %41, %411 : vector<1x5xf32>
    %413 = arith.addf %410, %412 : vector<1x5xf32>
    %414 = vector.broadcast %98 : vector<1x1xf32> to vector<1x5xf32>
    %415 = arith.mulf %28, %414 : vector<1x5xf32>
    %416 = arith.addf %413, %415 : vector<1x5xf32>
    %417 = arith.subf %408, %416 : vector<1x5xf32>
    %cst_113 = arith.constant 0.000000e+00 : f32
    %418 = vector.broadcast %cst_113 : f32 to vector<1x5xf32>
    %419 = arith.cmpf olt, %417, %418 : vector<1x5xf32>
    %cst_114 = arith.constant 0.000000e+00 : f32
    %420 = vector.broadcast %cst_114 : f32 to vector<1x5xf32>
    %421 = arith.subf %420, %369 : vector<1x5xf32>
    %422 = arith.select %419, %421, %369 : vector<1x5xi1>, vector<1x5xf32>
    %423 = vector.broadcast %91 : vector<1x1xf32> to vector<1x5xf32>
    %424 = arith.mulf %38, %423 : vector<1x5xf32>
    %425 = vector.broadcast %95 : vector<1x1xf32> to vector<1x5xf32>
    %426 = arith.mulf %18, %425 : vector<1x5xf32>
    %427 = arith.addf %424, %426 : vector<1x5xf32>
    %428 = vector.broadcast %98 : vector<1x1xf32> to vector<1x5xf32>
    %429 = arith.mulf %35, %428 : vector<1x5xf32>
    %430 = arith.addf %427, %429 : vector<1x5xf32>
    %431 = vector.broadcast %93 : vector<1x1xf32> to vector<1x5xf32>
    %432 = arith.mulf %36, %431 : vector<1x5xf32>
    %433 = vector.broadcast %73 : vector<1x1xf32> to vector<1x5xf32>
    %434 = arith.mulf %40, %433 : vector<1x5xf32>
    %435 = arith.addf %432, %434 : vector<1x5xf32>
    %436 = vector.broadcast %90 : vector<1x1xf32> to vector<1x5xf32>
    %437 = arith.mulf %43, %436 : vector<1x5xf32>
    %438 = arith.addf %435, %437 : vector<1x5xf32>
    %439 = arith.subf %430, %438 : vector<1x5xf32>
    %cst_115 = arith.constant 0.000000e+00 : f32
    %440 = vector.broadcast %cst_115 : f32 to vector<1x5xf32>
    %441 = arith.cmpf olt, %439, %440 : vector<1x5xf32>
    %cst_116 = arith.constant 0.000000e+00 : f32
    %442 = vector.broadcast %cst_116 : f32 to vector<1x5xf32>
    %443 = arith.subf %442, %378 : vector<1x5xf32>
    %444 = arith.select %441, %443, %378 : vector<1x5xi1>, vector<1x5xf32>
    %c0_117 = arith.constant 0 : index
    %c0_118 = arith.constant 0 : index
    %c0_119 = arith.constant 0 : index
    %c0_120 = arith.constant 0 : index
    %445 = vector.load %arg8[%c0_117, %c0_118, %c0_119, %c0_120] : memref<1x1x76x5xf32, #tpu.memory_space<vmem>>, vector<1x1x8x5xf32>
    %446 = vector.shape_cast %445 : vector<1x1x8x5xf32> to vector<8x5xf32>
    %447 = vector.shape_cast %127 : vector<8x5xf32> to vector<1x1x8x5xf32>
    tpu.vector_store %arg8[%c0_117, %c0_118, %c0_119, %c0_120], %447 {strides = array<i32>} : memref<1x1x76x5xf32, #tpu.memory_space<vmem>>, vector<1x1x8x5xf32>,
    %c0_121 = arith.constant 0 : index
    %c0_122 = arith.constant 0 : index
    %c8 = arith.constant 8 : index
    %c0_123 = arith.constant 0 : index
    %448 = vector.load %arg8[%c0_121, %c0_122, %c8, %c0_123] : memref<1x1x76x5xf32, #tpu.memory_space<vmem>>, vector<1x1x8x5xf32>
    %449 = vector.shape_cast %448 : vector<1x1x8x5xf32> to vector<8x5xf32>
    %450 = vector.shape_cast %135 : vector<8x5xf32> to vector<1x1x8x5xf32>
    tpu.vector_store %arg8[%c0_121, %c0_122, %c8, %c0_123], %450 {strides = array<i32>} : memref<1x1x76x5xf32, #tpu.memory_space<vmem>>, vector<1x1x8x5xf32>,
    %c0_124 = arith.constant 0 : index
    %c0_125 = arith.constant 0 : index
    %c16 = arith.constant 16 : index
    %c0_126 = arith.constant 0 : index
    %451 = vector.load %arg8[%c0_124, %c0_125, %c16, %c0_126] : memref<1x1x76x5xf32, #tpu.memory_space<vmem>>, vector<1x1x8x5xf32>
    %452 = vector.shape_cast %451 : vector<1x1x8x5xf32> to vector<8x5xf32>
    %453 = vector.shape_cast %143 : vector<8x5xf32> to vector<1x1x8x5xf32>
    tpu.vector_store %arg8[%c0_124, %c0_125, %c16, %c0_126], %453 {strides = array<i32>} : memref<1x1x76x5xf32, #tpu.memory_space<vmem>>, vector<1x1x8x5xf32>,
    %c0_127 = arith.constant 0 : index
    %c0_128 = arith.constant 0 : index
    %c24 = arith.constant 24 : index
    %c0_129 = arith.constant 0 : index
    %454 = vector.load %arg8[%c0_127, %c0_128, %c24, %c0_129] : memref<1x1x76x5xf32, #tpu.memory_space<vmem>>, vector<1x1x8x5xf32>
    %455 = vector.shape_cast %454 : vector<1x1x8x5xf32> to vector<8x5xf32>
    %456 = vector.shape_cast %119 : vector<8x5xf32> to vector<1x1x8x5xf32>
    tpu.vector_store %arg8[%c0_127, %c0_128, %c24, %c0_129], %456 {strides = array<i32>} : memref<1x1x76x5xf32, #tpu.memory_space<vmem>>, vector<1x1x8x5xf32>,
    %c0_130 = arith.constant 0 : index
    %c0_131 = arith.constant 0 : index
    %c32 = arith.constant 32 : index
    %c0_132 = arith.constant 0 : index
    %457 = vector.load %arg8[%c0_130, %c0_131, %c32, %c0_132] : memref<1x1x76x5xf32, #tpu.memory_space<vmem>>, vector<1x1x8x5xf32>
    %458 = vector.shape_cast %457 : vector<1x1x8x5xf32> to vector<8x5xf32>
    %459 = vector.shape_cast %212 : vector<8x5xf32> to vector<1x1x8x5xf32>
    tpu.vector_store %arg8[%c0_130, %c0_131, %c32, %c0_132], %459 {strides = array<i32>} : memref<1x1x76x5xf32, #tpu.memory_space<vmem>>, vector<1x1x8x5xf32>,
    %c0_133 = arith.constant 0 : index
    %c0_134 = arith.constant 0 : index
    %c40 = arith.constant 40 : index
    %c0_135 = arith.constant 0 : index
    %460 = vector.load %arg8[%c0_133, %c0_134, %c40, %c0_135] : memref<1x1x76x5xf32, #tpu.memory_space<vmem>>, vector<1x1x8x5xf32>
    %461 = vector.shape_cast %460 : vector<1x1x8x5xf32> to vector<8x5xf32>
    %462 = vector.shape_cast %285 : vector<8x5xf32> to vector<1x1x8x5xf32>
    tpu.vector_store %arg8[%c0_133, %c0_134, %c40, %c0_135], %462 {strides = array<i32>} : memref<1x1x76x5xf32, #tpu.memory_space<vmem>>, vector<1x1x8x5xf32>,
    %c0_136 = arith.constant 0 : index
    %c0_137 = arith.constant 0 : index
    %c48 = arith.constant 48 : index
    %c0_138 = arith.constant 0 : index
    %463 = vector.load %arg8[%c0_136, %c0_137, %c48, %c0_138] : memref<1x1x76x5xf32, #tpu.memory_space<vmem>>, vector<1x1x8x5xf32>
    %464 = vector.shape_cast %463 : vector<1x1x8x5xf32> to vector<8x5xf32>
    %465 = vector.shape_cast %296 : vector<8x5xf32> to vector<1x1x8x5xf32>
    tpu.vector_store %arg8[%c0_136, %c0_137, %c48, %c0_138], %465 {strides = array<i32>} : memref<1x1x76x5xf32, #tpu.memory_space<vmem>>, vector<1x1x8x5xf32>,
    %c0_139 = arith.constant 0 : index
    %c0_140 = arith.constant 0 : index
    %c56 = arith.constant 56 : index
    %c0_141 = arith.constant 0 : index
    %466 = vector.load %arg8[%c0_139, %c0_140, %c56, %c0_141] : memref<1x1x76x5xf32, #tpu.memory_space<vmem>>, vector<1x1x8x5xf32>
    %467 = vector.shape_cast %466 : vector<1x1x8x5xf32> to vector<8x5xf32>
    %468 = vector.shape_cast %307 : vector<8x5xf32> to vector<1x1x8x5xf32>
    tpu.vector_store %arg8[%c0_139, %c0_140, %c56, %c0_141], %468 {strides = array<i32>} : memref<1x1x76x5xf32, #tpu.memory_space<vmem>>, vector<1x1x8x5xf32>,
    %c0_142 = arith.constant 0 : index
    %c0_143 = arith.constant 0 : index
    %c64 = arith.constant 64 : index
    %c0_144 = arith.constant 0 : index
    %469 = vector.load %arg8[%c0_142, %c0_143, %c64, %c0_144] : memref<1x1x76x5xf32, #tpu.memory_space<vmem>>, vector<1x1x8x5xf32>
    %470 = vector.shape_cast %469 : vector<1x1x8x5xf32> to vector<8x5xf32>
    %471 = vector.shape_cast %318 : vector<8x5xf32> to vector<1x1x8x5xf32>
    tpu.vector_store %arg8[%c0_142, %c0_143, %c64, %c0_144], %471 {strides = array<i32>} : memref<1x1x76x5xf32, #tpu.memory_space<vmem>>, vector<1x1x8x5xf32>,
    %472 = tpu.concatenate %351, %400, %422, %444 in 0 : vector<1x5xf32>, vector<1x5xf32>, vector<1x5xf32>, vector<1x5xf32> -> vector<4x5xf32>
    %c0_145 = arith.constant 0 : index
    %c0_146 = arith.constant 0 : index
    %c72 = arith.constant 72 : index
    %c0_147 = arith.constant 0 : index
    %473 = vector.load %arg8[%c0_145, %c0_146, %c72, %c0_147] : memref<1x1x76x5xf32, #tpu.memory_space<vmem>>, vector<1x1x4x5xf32>
    %474 = vector.shape_cast %473 : vector<1x1x4x5xf32> to vector<4x5xf32>
    %475 = vector.shape_cast %472 : vector<4x5xf32> to vector<1x1x4x5xf32>
    tpu.vector_store %arg8[%c0_145, %c0_146, %c72, %c0_147], %475 {strides = array<i32>} : memref<1x1x76x5xf32, #tpu.memory_space<vmem>>, vector<1x1x4x5xf32>,
    return
  }
  func.func @transform_0(%arg0: i32, %arg1: i32) -> (i32, i32, i32) {
    %c0_i32 = arith.constant 0 : i32
    %c0_i32_0 = arith.constant 0 : i32
    %c0_i32_1 = arith.constant 0 : i32
    return %arg0, %c0_i32, %c0_i32_0 : i32, i32, i32
  }
  func.func @transform_1(%arg0: i32, %arg1: i32) -> (i32, i32, i32, i32) {
    %c0_i32 = arith.constant 0 : i32
    %c0_i32_0 = arith.constant 0 : i32
    %c0_i32_1 = arith.constant 0 : i32
    %c0_i32_2 = arith.constant 0 : i32
    return %arg0, %c0_i32, %c0_i32_0, %c0_i32_1 : i32, i32, i32, i32
  }
  func.func @transform_2(%arg0: i32, %arg1: i32) -> (i32, i32, i32, i32) {
    %c0_i32 = arith.constant 0 : i32
    %c0_i32_0 = arith.constant 0 : i32
    %c0_i32_1 = arith.constant 0 : i32
    return %arg0, %arg1, %c0_i32, %c0_i32_0 : i32, i32, i32, i32
  }
  func.func @transform_3(%arg0: i32, %arg1: i32) -> (i32, i32, i32, i32) {
    %c0_i32 = arith.constant 0 : i32
    %c0_i32_0 = arith.constant 0 : i32
    %c0_i32_1 = arith.constant 0 : i32
    return %arg0, %arg1, %c0_i32, %c0_i32_0 : i32, i32, i32, i32
  }
  func.func @transform_4(%arg0: i32, %arg1: i32) -> (i32, i32, i32) {
    %c0_i32 = arith.constant 0 : i32
    %c0_i32_0 = arith.constant 0 : i32
    %c0_i32_1 = arith.constant 0 : i32
    return %arg0, %c0_i32, %c0_i32_0 : i32, i32, i32
  }
  func.func @transform_5(%arg0: i32, %arg1: i32) -> (i32, i32, i32, i32) {
    %c0_i32 = arith.constant 0 : i32
    %c0_i32_0 = arith.constant 0 : i32
    %c0_i32_1 = arith.constant 0 : i32
    %c0_i32_2 = arith.constant 0 : i32
    return %arg0, %c0_i32, %c0_i32_0, %c0_i32_1 : i32, i32, i32, i32
  }
  func.func @transform_6(%arg0: i32, %arg1: i32) -> (i32, i32, i32, i32) {
    %c0_i32 = arith.constant 0 : i32
    %c0_i32_0 = arith.constant 0 : i32
    %c0_i32_1 = arith.constant 0 : i32
    return %arg0, %arg1, %c0_i32, %c0_i32_0 : i32, i32, i32, i32
  }
}

</mosaic_0001>

<llo_original>
// kernel: localizer_forward.1
$region0: #{localizer_forward.1}
  #allocation0 [shape = 'u32[]', space=smem, size = 0x4, offset = 0x4, fixed_abs, tag = 'smem constant byte address 0x4 - core index']
  #allocation1 [shape = 'u32[72,128]{1,0:T(1,128)}', space=vmem, size = 0x9000, scoped, tag = 'internal scratch']
  %s0 = inlined_call_operand.vmem [shape: f32[2,3,5], index: 0, kind: input, shape index: {}]
  %s1 = inlined_call_operand.vmem [shape: f32[2,6,8,5], index: 1, kind: input, shape index: {}]
  %s2 = inlined_call_operand.vmem [shape: f32[2,5,8,6], index: 2, kind: input, shape index: {}]
  %s3 = inlined_call_operand.vmem [shape: f32[2,5,1,6], index: 3, kind: input, shape index: {}]
  %s4 = inlined_call_operand.vmem [shape: f32[2,9,5], index: 4, kind: output, shape index: {0}]
  %s5 = inlined_call_operand.vmem [shape: f32[2,6,8,5], index: 5, kind: output, shape index: {1}]
  %s6 = inlined_call_operand.vmem [shape: f32[2,5,76,5], index: 6, kind: output, shape index: {2}]
  %7 = xla_tuple %s4, %s5, %s6
  %s8 = sld [smem:[#allocation0]]
  $region69: #{localizer_forward.1} parent=0
    _
  %s10 = ssub.s32 1, %s8
  %s11 = scalar_select 0, %s10, %s8
  loop: start=0, step=1, limit=12
  $region2: #{localizer_forward.1} parent=0 // loop_pre_header
    _
  $region3: #{localizer_forward.1} parent=0 // loop_header
    %s13 = sphi 0, %s17
    %p14 = scmp.ge.s32.totalorder %s13, 12
    %s20 = sphi 0, %s32
    %s21 = sphi 0, %s28
    %s22 = sphi 0, %s20
    %s23 = sphi 0, %s21
    %s24 = sphi 0, %s22
    %s25 = sphi 0, %s23
    %s35 = sphi 0, %s37
    %s38 = sphi 0, %s35
    %s39 = sphi 0, %s38
    %s55 = sphi 0, %s39
    %s61 = sphi 0, %s63
    %s64 = sphi 0, %s61
    %s65 = sphi 0, %s64
    %s81 = sphi 0, %s65
    %s89 = sphi 0, %s91
    %s92 = sphi 0, %s89
    %s93 = sphi 0, %s92
    %s109 = sphi 0, %s93
    %s117 = sphi 0, %s119
    %s120 = sphi 0, %s117
    %s121 = sphi 0, %s120
    %s137 = sphi 0, %s121
    %s143 = sphi 0, %s145
    %s146 = sphi 0, %s143
    %s147 = sphi 0, %s146
    %s163 = sphi 0, %s147
    %s169 = sphi 0, %s171
    %s172 = sphi 0, %s169
    %s173 = sphi 0, %s172
    %s189 = sphi 0, %s173
    %s197 = sphi 0, %s199
    %s200 = sphi 0, %s197
    %s201 = sphi 0, %s200
    %s217 = sphi 0, %s201
  $region4: #{localizer_forward.1} parent=0 // loop_header_branch
    %16 = sbr.rel (%p14) target = $region8
  $region5: #{localizer_forward.1} parent=0 // loop_body
    %s18 = ssub.s32 %s13, 1
    %s19 = ssub.s32 %s13, 2
    %s26 = sadd.s32 1, %s21
    %p27 = scmp.ge.s32.totalorder %s26, 5
    %s28 = scalar_select %p27, 0, %s26
    %s29 = sadd.s32 1, %s20
    %s30 = scalar_select %p27, %s29, %s20
    %p31 = scmp.ge.s32.totalorder %s30, 2
    %s32 = scalar_select %p31, 0, %s30
    %s33 = ssub.s32 %s20, %s32
    %p34 = scmp.eq.s32.totalorder %s33, 0
    %s36 = sadd.s32 %s35, 1
    %s37 = scalar_select %p34, %s35, %s36
    %p40 = pneg %p34
    %p41 = scmp.eq.s32.totalorder %s13, 9
    %p42 = por %p40, %p41
    %p43 = scmp.ne.s32.totalorder %s35, %s38
    %p44 = scmp.eq.s32.totalorder %s13, 0
    %p45 = por %p43, %p44
    %p46 = scmp.ne.s32.totalorder %s35, %s38
    %p47 = scmp.eq.s32.totalorder %s18, 9
    %p48 = por %p46, %p47
    %p49 = scmp.ne.s32.totalorder %s38, %s39
    %p50 = scmp.eq.s32.totalorder %s18, 0
    %p51 = por %p49, %p50
    %p52 = scmp.ne.s32.totalorder %s38, %s39
    %p53 = scmp.eq.s32.totalorder %s19, 9
    %p54 = por %p52, %p53
    %p56 = scmp.ne.s32.totalorder %s39, %s55
    %p57 = scmp.eq.s32.totalorder %s19, 0
    %p58 = por %p56, %p57
    %s59 = ssub.s32 %s20, %s32
    %p60 = scmp.eq.s32.totalorder %s59, 0
    %s62 = sadd.s32 %s61, 1
    %s63 = scalar_select %p60, %s61, %s62
    %p66 = pneg %p60
    %p67 = scmp.eq.s32.totalorder %s13, 9
    %p68 = por %p66, %p67
    %p69 = scmp.ne.s32.totalorder %s61, %s64
    %p70 = scmp.eq.s32.totalorder %s13, 0
    %p71 = por %p69, %p70
    %p72 = scmp.ne.s32.totalorder %s61, %s64
    %p73 = scmp.eq.s32.totalorder %s18, 9
    %p74 = por %p72, %p73
    %p75 = scmp.ne.s32.totalorder %s64, %s65
    %p76 = scmp.eq.s32.totalorder %s18, 0
    %p77 = por %p75, %p76
    %p78 = scmp.ne.s32.totalorder %s64, %s65
    %p79 = scmp.eq.s32.totalorder %s19, 9
    %p80 = por %p78, %p79
    %p82 = scmp.ne.s32.totalorder %s65, %s81
    %p83 = scmp.eq.s32.totalorder %s19, 0
    %p84 = por %p82, %p83
    %s85 = ssub.s32 %s20, %s32
    %s86 = ssub.s32 %s21, %s28
    %s87 = sor.u32 %s85, %s86
    %p88 = scmp.eq.s32.totalorder %s87, 0
    %s90 = sadd.s32 %s89, 1
    %s91 = scalar_select %p88, %s89, %s90
    %p94 = pneg %p88
    %p95 = scmp.eq.s32.totalorder %s13, 9
    %p96 = por %p94, %p95
    %p97 = scmp.ne.s32.totalorder %s89, %s92
    %p98 = scmp.eq.s32.totalorder %s13, 0
    %p99 = por %p97, %p98
    %p100 = scmp.ne.s32.totalorder %s89, %s92
    %p101 = scmp.eq.s32.totalorder %s18, 9
    %p102 = por %p100, %p101
    %p103 = scmp.ne.s32.totalorder %s92, %s93
    %p104 = scmp.eq.s32.totalorder %s18, 0
    %p105 = por %p103, %p104
    %p106 = scmp.ne.s32.totalorder %s92, %s93
    %p107 = scmp.eq.s32.totalorder %s19, 9
    %p108 = por %p106, %p107
    %p110 = scmp.ne.s32.totalorder %s93, %s109
    %p111 = scmp.eq.s32.totalorder %s19, 0
    %p112 = por %p110, %p111
    %s113 = ssub.s32 %s20, %s32
    %s114 = ssub.s32 %s21, %s28
    %s115 = sor.u32 %s113, %s114
    %p116 = scmp.eq.s32.totalorder %s115, 0
    %s118 = sadd.s32 %s117, 1
    %s119 = scalar_select %p116, %s117, %s118
    %p122 = pneg %p116
    %p123 = scmp.eq.s32.totalorder %s13, 9
    %p124 = por %p122, %p123
    %p125 = scmp.ne.s32.totalorder %s117, %s120
    %p126 = scmp.eq.s32.totalorder %s13, 0
    %p127 = por %p125, %p126
    %p128 = scmp.ne.s32.totalorder %s117, %s120
    %p129 = scmp.eq.s32.totalorder %s18, 9
    %p130 = por %p128, %p129
    %p131 = scmp.ne.s32.totalorder %s120, %s121
    %p132 = scmp.eq.s32.totalorder %s18, 0
    %p133 = por %p131, %p132
    %p134 = scmp.ne.s32.totalorder %s120, %s121
    %p135 = scmp.eq.s32.totalorder %s19, 9
    %p136 = por %p134, %p135
    %p138 = scmp.ne.s32.totalorder %s121, %s137
    %p139 = scmp.eq.s32.totalorder %s19, 0
    %p140 = por %p138, %p139
    %s141 = ssub.s32 %s20, %s32
    %p142 = scmp.eq.s32.totalorder %s141, 0
    %s144 = sadd.s32 %s143, 1
    %s145 = scalar_select %p142, %s143, %s144
    %p148 = pneg %p142
    %p149 = scmp.eq.s32.totalorder %s13, 9
    %p150 = por %p148, %p149
    %p151 = scmp.ne.s32.totalorder %s143, %s146
    %p152 = scmp.eq.s32.totalorder %s13, 0
    %p153 = por %p151, %p152
    %p154 = scmp.ne.s32.totalorder %s143, %s146
    %p155 = scmp.eq.s32.totalorder %s18, 9
    %p156 = por %p154, %p155
    %p157 = scmp.ne.s32.totalorder %s146, %s147
    %p158 = scmp.eq.s32.totalorder %s18, 0
    %p159 = por %p157, %p158
    %p160 = scmp.ne.s32.totalorder %s146, %s147
    %p161 = scmp.eq.s32.totalorder %s19, 9
    %p162 = por %p160, %p161
    %p164 = scmp.ne.s32.totalorder %s147, %s163
    %p165 = scmp.eq.s32.totalorder %s19, 0
    %p166 = por %p164, %p165
    %s167 = ssub.s32 %s20, %s32
    %p168 = scmp.eq.s32.totalorder %s167, 0
    %s170 = sadd.s32 %s169, 1
    %s171 = scalar_select %p168, %s169, %s170
    %p174 = pneg %p168
    %p175 = scmp.eq.s32.totalorder %s13, 9
    %p176 = por %p174, %p175
    %p177 = scmp.ne.s32.totalorder %s169, %s172
    %p178 = scmp.eq.s32.totalorder %s13, 0
    %p179 = por %p177, %p178
    %p180 = scmp.ne.s32.totalorder %s169, %s172
    %p181 = scmp.eq.s32.totalorder %s18, 9
    %p182 = por %p180, %p181
    %p183 = scmp.ne.s32.totalorder %s172, %s173
    %p184 = scmp.eq.s32.totalorder %s18, 0
    %p185 = por %p183, %p184
    %p186 = scmp.ne.s32.totalorder %s172, %s173
    %p187 = scmp.eq.s32.totalorder %s19, 9
    %p188 = por %p186, %p187
    %p190 = scmp.ne.s32.totalorder %s173, %s189
    %p191 = scmp.eq.s32.totalorder %s19, 0
    %p192 = por %p190, %p191
    %s193 = ssub.s32 %s20, %s32
    %s194 = ssub.s32 %s21, %s28
    %s195 = sor.u32 %s193, %s194
    %p196 = scmp.eq.s32.totalorder %s195, 0
    %s198 = sadd.s32 %s197, 1
    %s199 = scalar_select %p196, %s197, %s198
    %p202 = pneg %p196
    %p203 = scmp.eq.s32.totalorder %s13, 9
    %p204 = por %p202, %p203
    %p205 = scmp.ne.s32.totalorder %s197, %s200
    %p206 = scmp.eq.s32.totalorder %s13, 0
    %p207 = por %p205, %p206
    %p208 = scmp.ne.s32.totalorder %s197, %s200
    %p209 = scmp.eq.s32.totalorder %s18, 9
    %p210 = por %p208, %p209
    %p211 = scmp.ne.s32.totalorder %s200, %s201
    %p212 = scmp.eq.s32.totalorder %s18, 0
    %p213 = por %p211, %p212
    %p214 = scmp.ne.s32.totalorder %s200, %s201
    %p215 = scmp.eq.s32.totalorder %s19, 9
    %p216 = por %p214, %p215
    %p218 = scmp.ne.s32.totalorder %s201, %s217
    %p219 = scmp.eq.s32.totalorder %s19, 0
    %p220 = por %p218, %p219
    %p221 = scmp.le.s32.totalorder 1, %s13
    %p222 = scmp.lt.s32.totalorder %s13, 11
    %p223 = pnand %p221, %p222
    %p224 = pneg %p223
    // Predicated region
    $region9: #{localizer_forward.1} parent=5 // pred_check
      _
    $region10: #{localizer_forward.1} parent=5 // pred_check_branch
      %226 = sbr.rel (%p223) target = $region12
    $region11: #{localizer_forward.1} parent=5 // pred_region
      %s227 = ssub.s32 %s13, 1
    $region12: #{localizer_forward.1} parent=5 // pred_fallthru
      _
    %p228 = scmp.lt.s32.totalorder %s13, 10
    // Predicated region
    $region13: #{localizer_forward.1} parent=5 // pred_check
      %p229 = pneg %p228
    $region14: #{localizer_forward.1} parent=5 // pred_check_branch
      %231 = sbr.rel (%p229) target = $region16
    $region15: #{localizer_forward.1} parent=5 // pred_region
      // Predicated region
      $region17: #{localizer_forward.1} parent=15 // pred_check
        %p232 = pneg %p45
      $region18: #{localizer_forward.1} parent=15 // pred_check_branch
        %234 = sbr.rel (%p232) target = $region20
      $region19: #{localizer_forward.1} parent=15 // pred_region
        %p235 = scmp.lt.s32.totalorder %s20, 1
        %s236 = scalar_select %p235, %s20, 1
        %s237 = smul.addr %s236, 4
        %s238 = scalar_lea.vmem %s0, %s237
      $region20: #{localizer_forward.1} parent=15 // pred_fallthru
        _
      // Predicated region
      $region21: #{localizer_forward.1} parent=15 // pred_check
        %p239 = pneg %p71
      $region22: #{localizer_forward.1} parent=15 // pred_check_branch
        %241 = sbr.rel (%p239) target = $region24
      $region23: #{localizer_forward.1} parent=15 // pred_region
        %p242 = scmp.lt.s32.totalorder %s20, 1
        %s243 = scalar_select %p242, %s20, 1
        %s244 = smul.addr %s243, 6
        %s245 = smul.addr %s244, 8
        %s246 = scalar_lea.vmem %s1, %s245
      $region24: #{localizer_forward.1} parent=15 // pred_fallthru
        _
      // Predicated region
      $region25: #{localizer_forward.1} parent=15 // pred_check
        %p247 = pneg %p99
      $region26: #{localizer_forward.1} parent=15 // pred_check_branch
        %249 = sbr.rel (%p247) target = $region28
      $region27: #{localizer_forward.1} parent=15 // pred_region
        %p250 = scmp.lt.s32.totalorder %s20, 1
        %s251 = scalar_select %p250, %s20, 1
        %p252 = scmp.lt.s32.totalorder %s21, 4
        %s253 = scalar_select %p252, %s21, 4
        %s254 = smul.addr %s251, 5
        %s255 = sadd.s32 %s253, %s254
        %s256 = smul.addr %s255, 8
        %s257 = scalar_lea.vmem %s2, %s256
      $region28: #{localizer_forward.1} parent=15 // pred_fallthru
        _
      // Predicated region
      $region29: #{localizer_forward.1} parent=15 // pred_check
        %p258 = pneg %p127
      $region30: #{localizer_forward.1} parent=15 // pred_check_branch
        %260 = sbr.rel (%p258) target = $region32
      $region31: #{localizer_forward.1} parent=15 // pred_region
        %p261 = scmp.lt.s32.totalorder %s20, 1
        %s262 = scalar_select %p261, %s20, 1
        %p263 = scmp.lt.s32.totalorder %s21, 4
        %s264 = scalar_select %p263, %s21, 4
        %s265 = smul.addr %s262, 5
        %s266 = sadd.s32 %s264, %s265
        %s267 = scalar_lea.vmem %s3, %s266
      $region32: #{localizer_forward.1} parent=15 // pred_fallthru
        _
    $region16: #{localizer_forward.1} parent=5 // pred_fallthru
      _
    %p268 = scmp.le.s32.totalorder 1, %s13
    %p269 = scmp.lt.s32.totalorder %s13, 11
    %p270 = pnand %p268, %p269
    %p271 = pneg %p270
    // Predicated region
    $region33: #{localizer_forward.1} parent=5 // pred_check
      _
    $region34: #{localizer_forward.1} parent=5 // pred_check_branch
      %273 = sbr.rel (%p270) target = $region36
    $region35: #{localizer_forward.1} parent=5 // pred_region
      %s274 = ssub.s32 %s13, 1
      %p275 = scmp.lt.s32.totalorder %s22, 1
      %s276 = scalar_select %p275, %s22, 1
      %s277 = smul.addr %s276, 4
      %s278 = scalar_lea.vmem %s0, %s277
      %p279 = pneg %p51
      %p280 = pneg %p48
      %p281 = scmp.lt.s32.totalorder %s22, 1
      %s282 = scalar_select %p281, %s22, 1
      %s283 = smul.addr %s282, 6
      %s284 = smul.addr %s283, 8
      %s285 = scalar_lea.vmem %s1, %s284
      %p286 = pneg %p77
      %p287 = pneg %p74
      %p288 = scmp.lt.s32.totalorder %s22, 1
      %s289 = scalar_select %p288, %s22, 1
      %p290 = scmp.lt.s32.totalorder %s23, 4
      %s291 = scalar_select %p290, %s23, 4
      %s292 = smul.addr %s289, 5
      %s293 = sadd.s32 %s291, %s292
      %s294 = smul.addr %s293, 8
      %s295 = scalar_lea.vmem %s2, %s294
      %p296 = pneg %p105
      %p297 = pneg %p102
      %p298 = scmp.lt.s32.totalorder %s22, 1
      %s299 = scalar_select %p298, %s22, 1
      %p300 = scmp.lt.s32.totalorder %s23, 4
      %s301 = scalar_select %p300, %s23, 4
      %s302 = smul.addr %s299, 5
      %s303 = sadd.s32 %s301, %s302
      %s304 = scalar_lea.vmem %s3, %s303
      %p305 = pneg %p133
      %p306 = pneg %p130
      %p307 = pneg %p159
      %p308 = pneg %p156
      %p309 = scmp.lt.s32.totalorder %s22, 1
      %s310 = scalar_select %p309, %s22, 1
      %s311 = smul.addr %s310, 2
      %s312 = smul.addr %s311, 8
      %s313 = scalar_lea.vmem %s4, %s312
      %p314 = pneg %p185
      %p315 = pneg %p182
      %p316 = scmp.lt.s32.totalorder %s22, 1
      %s317 = scalar_select %p316, %s22, 1
      %s318 = smul.addr %s317, 6
      %s319 = smul.addr %s318, 8
      %s320 = scalar_lea.vmem %s5, %s319
      %p321 = pneg %p213
      %p322 = pneg %p210
      %p323 = scmp.lt.s32.totalorder %s22, 1
      %s324 = scalar_select %p323, %s22, 1
      %p325 = scmp.lt.s32.totalorder %s23, 4
      %s326 = scalar_select %p325, %s23, 4
      %s327 = smul.addr %s326, 10
      %s328 = smul.addr %s324, 50
      %s329 = sadd.s32 %s327, %s328
      %s330 = smul.addr %s329, 8
      %s331 = scalar_lea.vmem %s6, %s330
      %p332 = scmp.lt.s32.totalorder %s22, 1
      %s333 = scalar_select %p332, %s22, 1
      %s334 = smul.addr %s333, 4
      %s335 = scalar_lea.vmem %s0, %s334
      %p336 = scmp.lt.s32.totalorder %s22, 1
      %s337 = scalar_select %p336, %s22, 1
      %s338 = smul.addr %s337, 6
      %s339 = smul.addr %s338, 8
      %s340 = scalar_lea.vmem %s1, %s339
      %p341 = scmp.lt.s32.totalorder %s22, 1
      %s342 = scalar_select %p341, %s22, 1
      %p343 = scmp.lt.s32.totalorder %s23, 4
      %s344 = scalar_select %p343, %s23, 4
      %s345 = smul.addr %s342, 5
      %s346 = sadd.s32 %s344, %s345
      %s347 = smul.addr %s346, 8
      %s348 = scalar_lea.vmem %s2, %s347
      %p349 = scmp.lt.s32.totalorder %s22, 1
      %s350 = scalar_select %p349, %s22, 1
      %p351 = scmp.lt.s32.totalorder %s23, 4
      %s352 = scalar_select %p351, %s23, 4
      %s353 = smul.addr %s350, 5
      %s354 = sadd.s32 %s352, %s353
      %s355 = scalar_lea.vmem %s3, %s354
      %p356 = scmp.lt.s32.totalorder %s22, 1
      %s357 = scalar_select %p356, %s22, 1
      %s358 = smul.addr %s357, 2
      %s359 = smul.addr %s358, 8
      %s360 = scalar_lea.vmem %s4, %s359
      %p361 = scmp.lt.s32.totalorder %s22, 1
      %s362 = scalar_select %p361, %s22, 1
      %s363 = smul.addr %s362, 6
      %s364 = smul.addr %s363, 8
      %s365 = scalar_lea.vmem %s5, %s364
      %p366 = scmp.lt.s32.totalorder %s22, 1
      %s367 = scalar_select %p366, %s22, 1
      %p368 = scmp.lt.s32.totalorder %s23, 4
      %s369 = scalar_select %p368, %s23, 4
      %s370 = smul.addr %s369, 10
      %s371 = smul.addr %s367, 50
      %s372 = sadd.s32 %s370, %s371
      %s373 = smul.addr %s372, 8
      %s374 = scalar_lea.vmem %s6, %s373
      %v375 = vld [vmem:[%s335] sm:$0x7]
      %v376 = vmul.f32 %v375, %v375
      %v378 = vrot.slane %v376, 1
      %v380 = vadd.f32 %v376, %v378
      %v381 = vrot.slane %v376, 2
      %v383 = vadd.f32 %v380, %v381
      %v384 = vrsqrt.pop %v383
      %v385 = vmul.f32 %v384, %v383
      %v386 = vmul.f32 %v385, %v384
      %v387 = vmul.f32 0.5, %v386
      %v388 = vsub.f32 1.5, %v387
      %v389 = vmul.f32 %v384, %v388
      %v390 = vmul.f32 %v383, %v389
      %vm391 = vcmp.eq.f32.partialorder %v383, inf
      %v392 = vsel %vm391, %v383, %v390
      %vm393 = vcmp.eq.f32.partialorder %v383, 0.0
      %v394 = vand.u32 %v383, 2147483648
      %v395 = vsel %vm393, %v394, %v392
      %vm396 = vcmp.gt.f32.partialorder %v380, 0.0
      %v397 = vsel %vm396, %v380, 1.0
      %v398 = vrsqrt.pop %v397
      %v399 = vmul.f32 %v398, %v397
      %v400 = vmul.f32 %v399, %v398
      %v401 = vmul.f32 0.5, %v400
      %v402 = vsub.f32 1.5, %v401
      %v403 = vmul.f32 %v398, %v402
      %vm404 = vweird.f32 %v397
      %vm405 = vweird.f32 %v398
      %vm406 = vmor %vm404, %vm405
      %v407 = vsel %vm406, %v398, %v403
      %v408 = vmul.f32 %v375, %v407
      %v409 = vsel %vm396, %v408, 1.0
      %v411 = vrot.slane %v407, 7
      %v413 = vmul.f32 %v375, %v411
      %v415 = vrot.slane %v413, 1
      %v417 = vsel %vm396, %v415, 0.0
      %v418 = vadd.f32 %v395, 1e-07
      %v420 = vrot.slane %v418, 6
      %v422 = vrcp.pop %v420
      %v423 = vmul.f32 %v420, %v422
      %v424 = vsub.f32 1.0, %v423
      %v425 = vmul.f32 %v422, %v424
      %v426 = vadd.f32 %v422, %v425
      %vm427 = vweird.f32 %v420
      %vm428 = vweird.f32 %v422
      %vm429 = vmor %vm427, %vm428
      %v430 = vsel %vm429, %v422, %v426
      %v431 = vand.u32 2147483647, %v420
      %vm432 = vcmp.eq.f32.partialorder %v431, 8.507059e+37
      %v433 = vand.u32 %v420, 2147483648
      %v434 = vor.u32 1.1754944e-38, %v433
      %v435 = vsel %vm432, %v434, %v430
      %v436 = vmul.f32 %v375, %v435
      %v437 = vmax.f32 %v436, -1.0
      %v438 = vmin.f32 %v437, 1.0
      %v439 = vmul.f32 %v438, %v438
      %v440 = vsub.f32 1.0, %v439
      %v441 = vmax.f32 %v440, 0.0
      %v442 = vrsqrt.pop %v441
      %v443 = vmul.f32 %v442, %v441
      %v444 = vmul.f32 %v443, %v442
      %v445 = vmul.f32 0.5, %v444
      %v446 = vsub.f32 1.5, %v445
      %v447 = vmul.f32 %v442, %v446
      %v448 = vmul.f32 %v441, %v447
      %vm449 = vcmp.eq.f32.partialorder %v441, inf
      %v450 = vsel %vm449, %v441, %v448
      %vm451 = vcmp.eq.f32.partialorder %v441, 0.0
      %v452 = vand.u32 %v441, 2147483648
      %v453 = vsel %vm451, %v452, %v450
      %v455 = vrot.slane %v409, 6
      %v457 = vmul.f32 %v438, %v455
      %v458 = vsub.f32 0.0, %v417
      %v459 = vmul.f32 %v453, %v455
      %v461 = vrot.slane %v417, 6
      %v463 = vmul.f32 %v438, %v461
      %v464 = vmul.f32 %v453, %v461
      %v465 = vsub.f32 0.0, %v453
      %p466 = scmp.eq.s32.totalorder %s23, 0
      // Predicated region
      $region37: #{localizer_forward.1} parent=35 // pred_check
        %p467 = pneg %p466
      $region38: #{localizer_forward.1} parent=35 // pred_check_branch
        %469 = sbr.rel (%p467) target = $region40
      $region39: #{localizer_forward.1} parent=35 // pred_region
        %v471 = vrot.slane %v457, 2
        %v474 = vrot.slane %v458, 7
        %v477 = vrot.slane %v463, 7
        %v479 = vrot.slane %v409, 4
        %v482 = vrot.slane %v464, 5
        %v485 = vrot.slane %v465, 4
        %v488 = vrot.slane %v438, 2
        %vm490 = vcmask 1040384
        %v491 = vsel %vm490, %v471, %v474
        %vm492 = vcmask 1041408
        %v493 = vsel %vm492, %v491, %v459
        %vm494 = vcmask 1042432
        %v495 = vsel %vm494, %v493, %v477
        %vm496 = vcmask 1043456
        %v497 = vsel %vm496, %v495, %v479
        %vm498 = vcmask 1044480
        %v499 = vsel %vm498, %v497, %v482
        %vm500 = vcmask 1045504
        %v501 = vsel %vm500, %v499, %v485
        %vm502 = vcmask 1046528
        %v503 = vsel %vm502, %v501, 0.0
        %vm504 = vcmask 39936
        %505 = vst.msk [vmem:[%s360] sm:$0xff] %vm504, %v503
        %vm506 = vcmask 32768
        %507 = vst.msk [vmem:[%s360 + $0x8] sm:$0x1] %vm506, %v488
        %v508 = vld [vmem:[%s340] sm:$0xff]
        %s509 = scalar_lea.vmem %s340, 8
        %v510 = vld [vmem:[%s509] sm:$0xff]
        %s511 = scalar_lea.vmem %s340, 16
        %v512 = vld [vmem:[%s511] sm:$0xff]
        %s513 = scalar_lea.vmem %s340, 24
        %v514 = vld [vmem:[%s513] sm:$0xff]
        %s515 = scalar_lea.vmem %s340, 32
        %v516 = vld [vmem:[%s515] sm:$0xff]
        %s517 = scalar_lea.vmem %s340, 40
        %v518 = vld [vmem:[%s517] sm:$0xff]
        %v519 = vperm.slane %v508, 7
        %v520 = vsub.f32 %v508, %v519
        %v521 = vperm.slane %v510, 7
        %v522 = vsub.f32 %v510, %v521
        %v523 = vperm.slane %v512, 7
        %v524 = vsub.f32 %v512, %v523
        %v525 = vperm.slane %v457, 2
        %v526 = vmul.f32 %v525, %v520
        %v527 = vperm.slane %v463, 2
        %v528 = vmul.f32 %v527, %v522
        %v529 = vadd.f32 %v526, %v528
        %v530 = vperm.slane %v465, 2
        %v531 = vmul.f32 %v530, %v524
        %v532 = vadd.f32 %v529, %v531
        %533 = vst.msk [vmem:[%s365] sm:$0xff] %vm504, %v532
        %v534 = vperm.slane %v458, 0
        %v535 = vmul.f32 %v534, %v520
        %v536 = vperm.slane %v409, 0
        %v537 = vmul.f32 %v536, %v522
        %v538 = vadd.f32 %v535, %v537
        %v539 = vmul.f32 %v524, 0.0
        %v540 = vadd.f32 %v538, %v539
        %s541 = scalar_lea.vmem %s365, 8
        %542 = vst.msk [vmem:[%s541] sm:$0xff] %vm504, %v540
        %v543 = vperm.slane %v459, 2
        %v544 = vmul.f32 %v543, %v520
        %v545 = vperm.slane %v464, 2
        %v546 = vmul.f32 %v545, %v522
        %v547 = vadd.f32 %v544, %v546
        %v548 = vperm.slane %v438, 2
        %v549 = vmul.f32 %v548, %v524
        %v550 = vadd.f32 %v547, %v549
        %s551 = scalar_lea.vmem %s365, 16
        %552 = vst.msk [vmem:[%s551] sm:$0xff] %vm504, %v550
        %v553 = vmul.f32 %v525, %v514
        %v554 = vmul.f32 %v527, %v516
        %v555 = vadd.f32 %v553, %v554
        %v556 = vmul.f32 %v530, %v518
        %v557 = vadd.f32 %v555, %v556
        %s558 = scalar_lea.vmem %s365, 24
        %559 = vst.msk [vmem:[%s558] sm:$0xff] %vm504, %v557
        %v560 = vmul.f32 %v534, %v514
        %v561 = vmul.f32 %v536, %v516
        %v562 = vadd.f32 %v560, %v561
        %v563 = vmul.f32 %v518, 0.0
        %v564 = vadd.f32 %v562, %v563
        %s565 = scalar_lea.vmem %s365, 32
        %566 = vst.msk [vmem:[%s565] sm:$0xff] %vm504, %v564
        %v567 = vmul.f32 %v543, %v514
        %v568 = vmul.f32 %v545, %v516
        %v569 = vadd.f32 %v567, %v568
        %v570 = vmul.f32 %v548, %v518
        %v571 = vadd.f32 %v569, %v570
        %s572 = scalar_lea.vmem %s365, 40
        %573 = vst.msk [vmem:[%s572] sm:$0xff] %vm504, %v571
      $region40: #{localizer_forward.1} parent=35 // pred_fallthru
        _
      %v574 = vld [vmem:[%s348] sm:$0xff]
      %v575 = vld [vmem:[%s355] sm:$0x1]
      %v576 = vmul.f32 %v575, %v575
      %578 = vrot.lane.b32.xlu0 %v576, 127
      %v579 = vpop.permute.xlu0 %578
      %v581 = vadd.f32 %v576, %v579
      %582 = vrot.lane.b32.xlu0 %v576, 126
      %v583 = vpop.permute.xlu0 %582
      %v585 = vadd.f32 %v581, %v583
      %v586 = vrsqrt.pop %v585
      %v587 = vmul.f32 %v586, %v585
      %v588 = vmul.f32 %v587, %v586
      %v589 = vmul.f32 0.5, %v588
      %v590 = vsub.f32 1.5, %v589
      %v591 = vmul.f32 %v586, %v590
      %v592 = vmul.f32 %v585, %v591
      %vm593 = vcmp.eq.f32.partialorder %v585, inf
      %v594 = vsel %vm593, %v585, %v592
      %vm595 = vcmp.eq.f32.partialorder %v585, 0.0
      %v596 = vand.u32 %v585, 2147483648
      %v597 = vsel %vm595, %v596, %v594
      %vm598 = vcmp.gt.f32.partialorder %v581, 0.0
      %v599 = vsel %vm598, %v581, 1.0
      %v600 = vrsqrt.pop %v599
      %v601 = vmul.f32 %v600, %v599
      %v602 = vmul.f32 %v601, %v600
      %v603 = vmul.f32 0.5, %v602
      %v604 = vsub.f32 1.5, %v603
      %v605 = vmul.f32 %v600, %v604
      %vm606 = vweird.f32 %v599
      %vm607 = vweird.f32 %v600
      %vm608 = vmor %vm606, %vm607
      %v609 = vsel %vm608, %v600, %v605
      %v610 = vmul.f32 %v575, %v609
      %v611 = vsel %vm598, %v610, 1.0
      %613 = vrot.lane.b32.xlu0 %v609, 1
      %v614 = vpop.permute.xlu0 %613
      %v616 = vmul.f32 %v575, %v614
      %618 = vrot.lane.b32.xlu0 %v616, 127
      %v619 = vpop.permute.xlu0 %618
      %v621 = vsel %vm598, %v619, 0.0
      %v622 = vadd.f32 %v597, 1e-07
      %624 = vrot.lane.b32.xlu0 %v622, 2
      %v625 = vpop.permute.xlu0 %624
      %v627 = vrcp.pop %v625
      %v628 = vmul.f32 %v625, %v627
      %v629 = vsub.f32 1.0, %v628
      %v630 = vmul.f32 %v627, %v629
      %v631 = vadd.f32 %v627, %v630
      %vm632 = vweird.f32 %v625
      %vm633 = vweird.f32 %v627
      %vm634 = vmor %vm632, %vm633
      %v635 = vsel %vm634, %v627, %v631
      %v636 = vand.u32 2147483647, %v625
      %vm637 = vcmp.eq.f32.partialorder %v636, 8.507059e+37
      %v638 = vand.u32 %v625, 2147483648
      %v639 = vor.u32 1.1754944e-38, %v638
      %v640 = vsel %vm637, %v639, %v635
      %v641 = vmul.f32 %v575, %v640
      %v642 = vmax.f32 %v641, -1.0
      %v643 = vmin.f32 %v642, 1.0
      %v644 = vmul.f32 %v643, %v643
      %v645 = vsub.f32 1.0, %v644
      %v646 = vmax.f32 %v645, 0.0
      %v647 = vrsqrt.pop %v646
      %v648 = vmul.f32 %v647, %v646
      %v649 = vmul.f32 %v648, %v647
      %v650 = vmul.f32 0.5, %v649
      %v651 = vsub.f32 1.5, %v650
      %v652 = vmul.f32 %v647, %v651
      %v653 = vmul.f32 %v646, %v652
      %vm654 = vcmp.eq.f32.partialorder %v646, inf
      %v655 = vsel %vm654, %v646, %v653
      %vm656 = vcmp.eq.f32.partialorder %v646, 0.0
      %v657 = vand.u32 %v646, 2147483648
      %v658 = vsel %vm656, %v657, %v655
      %660 = vrot.lane.b32.xlu0 %v611, 2
      %v661 = vpop.permute.xlu0 %660
      %v663 = vmul.f32 %v643, %v661
      %v664 = vsub.f32 0.0, %v621
      %v665 = vmul.f32 %v658, %v661
      %667 = vrot.lane.b32.xlu0 %v621, 2
      %v668 = vpop.permute.xlu0 %667
      %v670 = vmul.f32 %v643, %v668
      %v671 = vmul.f32 %v658, %v668
      %v672 = vsub.f32 0.0, %v658
      %v673 = vld [vmem:[%s340 + $0x7] sm:$0x1]
      %s674 = scalar_lea.vmem %s340, 8
      %v675 = vld [vmem:[%s674 + $0x7] sm:$0x1]
      %s676 = scalar_lea.vmem %s340, 16
      %v677 = vld [vmem:[%s676 + $0x7] sm:$0x1]
      %679 = vset.pattern.permute.xlu0 0
      %680 = vperm.xlu0 %679, %v574
      %v681 = vpop.permute.xlu0 %680
      %v683 = vperm.slane %v673, 0
      %v684 = vsub.f32 %v681, %v683
      %685 = vset.pattern.permute.xlu0 1
      %686 = vperm.xlu0 %685, %v574
      %v687 = vpop.permute.xlu0 %686
      %v689 = vperm.slane %v675, 0
      %v690 = vsub.f32 %v687, %v689
      %691 = vset.pattern.permute.xlu0 2
      %692 = vperm.xlu0 %691, %v574
      %v693 = vpop.permute.xlu0 %692
      %v695 = vperm.slane %v677, 0
      %v696 = vsub.f32 %v693, %v695
      %v697 = vmul.f32 %v684, %v684
      %v698 = vmul.f32 %v690, %v690
      %v699 = vadd.f32 %v697, %v698
      %v700 = vmul.f32 %v696, %v696
      %v701 = vadd.f32 %v699, %v700
      %v702 = vrsqrt.pop %v701
      %v703 = vmul.f32 %v702, %v701
      %v704 = vmul.f32 %v703, %v702
      %v705 = vmul.f32 0.5, %v704
      %v706 = vsub.f32 1.5, %v705
      %v707 = vmul.f32 %v702, %v706
      %v708 = vmul.f32 %v701, %v707
      %vm709 = vcmp.eq.f32.partialorder %v701, inf
      %v710 = vsel %vm709, %v701, %v708
      %vm711 = vcmp.eq.f32.partialorder %v701, 0.0
      %v712 = vand.u32 %v701, 2147483648
      %v713 = vsel %vm711, %v712, %v710
      %v714 = vperm.slane %v457, 2
      %v715 = vmul.f32 %v714, %v684
      %v716 = vperm.slane %v463, 2
      %v717 = vmul.f32 %v716, %v690
      %v718 = vadd.f32 %v715, %v717
      %v719 = vperm.slane %v465, 2
      %v720 = vmul.f32 %v719, %v696
      %v721 = vadd.f32 %v718, %v720
      %v722 = vperm.slane %v458, 0
      %v723 = vmul.f32 %v722, %v684
      %v724 = vperm.slane %v409, 0
      %v725 = vmul.f32 %v724, %v690
      %v726 = vadd.f32 %v723, %v725
      %v727 = vmul.f32 %v696, 0.0
      %v728 = vadd.f32 %v726, %v727
      %v729 = vperm.slane %v459, 2
      %v730 = vmul.f32 %v729, %v684
      %v731 = vperm.slane %v464, 2
      %v732 = vmul.f32 %v731, %v690
      %v733 = vadd.f32 %v730, %v732
      %v734 = vperm.slane %v438, 2
      %v735 = vmul.f32 %v734, %v696
      %v736 = vadd.f32 %v733, %v735
      %vm737 = vcmp.eq.f32.partialorder %v721, 0.0
      %v738 = vsel %vm737, 1.0, %v721
      %v739 = vrcp.pop %v738
      %v740 = vmul.f32 %v738, %v739
      %v741 = vsub.f32 1.0, %v740
      %v742 = vmul.f32 %v739, %v741
      %v743 = vadd.f32 %v739, %v742
      %vm744 = vweird.f32 %v738
      %vm745 = vweird.f32 %v739
      %vm746 = vmor %vm744, %vm745
      %v747 = vsel %vm746, %v739, %v743
      %v748 = vand.u32 2147483647, %v738
      %vm749 = vcmp.eq.f32.partialorder %v748, 8.507059e+37
      %v750 = vand.u32 %v738, 2147483648
      %v751 = vor.u32 1.1754944e-38, %v750
      %v752 = vsel %vm749, %v751, %v747
      %v753 = vmul.f32 %v728, %v752
      %vm754 = vcmp.lt.f32.partialorder %v753, 0.0
      %v755 = vsel %vm754, -1.0, 1.0
      %v756 = vand.u32 2147483647, %v753
      %vm757 = vcmp.gt.f32.partialorder %v756, 2.4142137
      %vm758 = vcmp.gt.f32.partialorder %v756, 0.41421357
      %v759 = vmax.f32 %v756, 1.0
      %v760 = vrcp.pop %v759
      %v761 = vmul.f32 %v759, %v760
      %v762 = vsub.f32 1.0, %v761
      %v763 = vmul.f32 %v760, %v762
      %v764 = vadd.f32 %v760, %v763
      %vm765 = vweird.f32 %v759
      %vm766 = vweird.f32 %v760
      %vm767 = vmor %vm765, %vm766
      %v768 = vsel %vm767, %v760, %v764
      %v769 = vand.u32 2147483647, %v759
      %vm770 = vcmp.eq.f32.partialorder %v769, 8.507059e+37
      %v771 = vand.u32 %v759, 2147483648
      %v772 = vor.u32 1.1754944e-38, %v771
      %v773 = vsel %vm770, %v772, %v768
      %v774 = vmul.f32 -1.0, %v773
      %v775 = vsub.f32 %v756, 1.0
      %v776 = vadd.f32 %v756, 1.0
      %v777 = vrcp.pop %v776
      %v778 = vmul.f32 %v776, %v777
      %v779 = vsub.f32 1.0, %v778
      %v780 = vmul.f32 %v777, %v779
      %v781 = vadd.f32 %v777, %v780
      %vm782 = vweird.f32 %v776
      %vm783 = vweird.f32 %v777
      %vm784 = vmor %vm782, %vm783
      %v785 = vsel %vm784, %v777, %v781
      %v786 = vand.u32 2147483647, %v776
      %vm787 = vcmp.eq.f32.partialorder %v786, 8.507059e+37
      %v788 = vand.u32 %v776, 2147483648
      %v789 = vor.u32 1.1754944e-38, %v788
      %v790 = vsel %vm787, %v789, %v785
      %v791 = vmul.f32 %v775, %v790
      %v792 = vsel %vm758, %v791, %v756
      %v793 = vsel %vm757, %v774, %v792
      %v794 = vsel %vm758, 0.7853982, 0.0
      %v795 = vsel %vm757, 1.5707964, %v794
      %v796 = vmul.f32 %v793, %v793
      %v797 = vmul.f32 %v796, 0.080537446
      %v798 = vsub.f32 %v797, 0.13877685
      %v799 = vmul.f32 %v798, %v796
      %v800 = vadd.f32 %v799, 0.19977711
      %v801 = vmul.f32 %v800, %v796
      %v802 = vsub.f32 %v801, 0.3333295
      %v803 = vmul.f32 %v802, %v796
      %v804 = vmul.f32 %v803, %v793
      %v805 = vadd.f32 %v804, %v793
      %v806 = vadd.f32 %v795, %v805
      %v807 = vmul.f32 %v755, %v806
      %vm808 = vcmp.lt.f32.partialorder %v721, 0.0
      %vm809 = vcmp.ge.f32.partialorder %v728, 0.0
      %v810 = vadd.f32 %v807, 3.1415927
      %v811 = vsub.f32 %v807, 3.1415927
      %v812 = vsel %vm809, %v810, %v811
      %v813 = vsel %vm808, %v812, %v807
      %vm814 = vcmp.gt.f32.partialorder %v728, 0.0
      %vm815 = vcmp.lt.f32.partialorder %v728, 0.0
      %v816 = vsel %vm815, -1.5707964, 0.0
      %v817 = vsel %vm814, 1.5707964, %v816
      %v818 = vsel %vm737, %v817, %v813
      %v819 = vmul.f32 %v721, %v721
      %v820 = vmul.f32 %v728, %v728
      %v821 = vadd.f32 %v819, %v820
      %v822 = vrsqrt.pop %v821
      %v823 = vmul.f32 %v822, %v821
      %v824 = vmul.f32 %v823, %v822
      %v825 = vmul.f32 0.5, %v824
      %v826 = vsub.f32 1.5, %v825
      %v827 = vmul.f32 %v822, %v826
      %v828 = vmul.f32 %v821, %v827
      %vm829 = vcmp.eq.f32.partialorder %v821, inf
      %v830 = vsel %vm829, %v821, %v828
      %vm831 = vcmp.eq.f32.partialorder %v821, 0.0
      %v832 = vand.u32 %v821, 2147483648
      %v833 = vsel %vm831, %v832, %v830
      %vm834 = vcmp.eq.f32.partialorder %v736, 0.0
      %v835 = vsel %vm834, 1.0, %v736
      %v836 = vrcp.pop %v835
      %v837 = vmul.f32 %v835, %v836
      %v838 = vsub.f32 1.0, %v837
      %v839 = vmul.f32 %v836, %v838
      %v840 = vadd.f32 %v836, %v839
      %vm841 = vweird.f32 %v835
      %vm842 = vweird.f32 %v836
      %vm843 = vmor %vm841, %vm842
      %v844 = vsel %vm843, %v836, %v840
      %v845 = vand.u32 2147483647, %v835
      %vm846 = vcmp.eq.f32.partialorder %v845, 8.507059e+37
      %v847 = vand.u32 %v835, 2147483648
      %v848 = vor.u32 1.1754944e-38, %v847
      %v849 = vsel %vm846, %v848, %v844
      %v850 = vmul.f32 %v833, %v849
      %vm851 = vcmp.lt.f32.partialorder %v850, 0.0
      %v852 = vsel %vm851, -1.0, 1.0
      %v853 = vand.u32 2147483647, %v850
      %vm854 = vcmp.gt.f32.partialorder %v853, 2.4142137
      %vm855 = vcmp.gt.f32.partialorder %v853, 0.41421357
      %v856 = vmax.f32 %v853, 1.0
      %v857 = vrcp.pop %v856
      %v858 = vmul.f32 %v856, %v857
      %v859 = vsub.f32 1.0, %v858
      %v860 = vmul.f32 %v857, %v859
      %v861 = vadd.f32 %v857, %v860
      %vm862 = vweird.f32 %v856
      %vm863 = vweird.f32 %v857
      %vm864 = vmor %vm862, %vm863
      %v865 = vsel %vm864, %v857, %v861
      %v866 = vand.u32 2147483647, %v856
      %vm867 = vcmp.eq.f32.partialorder %v866, 8.507059e+37
      %v868 = vand.u32 %v856, 2147483648
      %v869 = vor.u32 1.1754944e-38, %v868
      %v870 = vsel %vm867, %v869, %v865
      %v871 = vmul.f32 -1.0, %v870
      %v872 = vsub.f32 %v853, 1.0
      %v873 = vadd.f32 %v853, 1.0
      %v874 = vrcp.pop %v873
      %v875 = vmul.f32 %v873, %v874
      %v876 = vsub.f32 1.0, %v875
      %v877 = vmul.f32 %v874, %v876
      %v878 = vadd.f32 %v874, %v877
      %vm879 = vweird.f32 %v873
      %vm880 = vweird.f32 %v874
      %vm881 = vmor %vm879, %vm880
      %v882 = vsel %vm881, %v874, %v878
      %v883 = vand.u32 2147483647, %v873
      %vm884 = vcmp.eq.f32.partialorder %v883, 8.507059e+37
      %v885 = vand.u32 %v873, 2147483648
      %v886 = vor.u32 1.1754944e-38, %v885
      %v887 = vsel %vm884, %v886, %v882
      %v888 = vmul.f32 %v872, %v887
      %v889 = vsel %vm855, %v888, %v853
      %v890 = vsel %vm854, %v871, %v889
      %v891 = vsel %vm855, 0.7853982, 0.0
      %v892 = vsel %vm854, 1.5707964, %v891
      %v893 = vmul.f32 %v890, %v890
      %v894 = vmul.f32 %v893, 0.080537446
      %v895 = vsub.f32 %v894, 0.13877685
      %v896 = vmul.f32 %v895, %v893
      %v897 = vadd.f32 %v896, 0.19977711
      %v898 = vmul.f32 %v897, %v893
      %v899 = vsub.f32 %v898, 0.3333295
      %v900 = vmul.f32 %v899, %v893
      %v901 = vmul.f32 %v900, %v890
      %v902 = vadd.f32 %v901, %v890
      %v903 = vadd.f32 %v892, %v902
      %v904 = vmul.f32 %v852, %v903
      %vm905 = vcmp.lt.f32.partialorder %v736, 0.0
      %vm906 = vcmp.ge.f32.partialorder %v833, 0.0
      %v907 = vadd.f32 %v904, 3.1415927
      %v908 = vsub.f32 %v904, 3.1415927
      %v909 = vsel %vm906, %v907, %v908
      %v910 = vsel %vm905, %v909, %v904
      %vm911 = vcmp.gt.f32.partialorder %v833, 0.0
      %vm912 = vcmp.lt.f32.partialorder %v833, 0.0
      %v913 = vsel %vm912, -1.5707964, 0.0
      %v914 = vsel %vm911, 1.5707964, %v913
      %v915 = vsel %vm834, %v914, %v910
      %916 = vset.pattern.permute.xlu0 3
      %917 = vperm.xlu0 %916, %v574
      %v918 = vpop.permute.xlu0 %917
      %v920 = vmul.f32 %v714, %v918
      %921 = vset.pattern.permute.xlu0 4
      %922 = vperm.xlu0 %921, %v574
      %v923 = vpop.permute.xlu0 %922
      %v925 = vmul.f32 %v716, %v923
      %v926 = vadd.f32 %v920, %v925
      %927 = vset.pattern.permute.xlu0 5
      %928 = vperm.xlu0 %927, %v574
      %v929 = vpop.permute.xlu0 %928
      %v931 = vmul.f32 %v719, %v929
      %v932 = vadd.f32 %v926, %v931
      %v933 = vmul.f32 %v722, %v918
      %v934 = vmul.f32 %v724, %v923
      %v935 = vadd.f32 %v933, %v934
      %v936 = vmul.f32 %v929, 0.0
      %v937 = vadd.f32 %v935, %v936
      %v938 = vmul.f32 %v729, %v918
      %v939 = vmul.f32 %v731, %v923
      %v940 = vadd.f32 %v938, %v939
      %v941 = vmul.f32 %v734, %v929
      %v942 = vadd.f32 %v940, %v941
      %944 = vset.pattern.permute.xlu0 5
      %945 = vperm.xlu0 %944, %v663
      %v946 = vpop.permute.xlu0 %945
      %v948 = vperm.slane %v946, 0
      %v949 = vmul.f32 %v457, %v948
      %951 = vset.pattern.permute.xlu0 5
      %952 = vperm.xlu0 %951, %v670
      %v953 = vpop.permute.xlu0 %952
      %v955 = vperm.slane %v953, 0
      %v956 = vmul.f32 %v463, %v955
      %v957 = vadd.f32 %v949, %v956
      %959 = vset.pattern.permute.xlu0 5
      %960 = vperm.xlu0 %959, %v672
      %v961 = vpop.permute.xlu0 %960
      %v963 = vperm.slane %v961, 0
      %v964 = vmul.f32 %v465, %v963
      %v965 = vadd.f32 %v957, %v964
      %967 = vset.pattern.permute.xlu0 3
      %968 = vperm.xlu0 %967, %v664
      %v969 = vpop.permute.xlu0 %968
      %v971 = vperm.slane %v969, 0
      %v972 = vmul.f32 %v458, %v971
      %973 = vset.pattern.permute.xlu0 3
      %974 = vperm.xlu0 %973, %v611
      %v975 = vpop.permute.xlu0 %974
      %v977 = vperm.slane %v975, 0
      %v978 = vmul.f32 %v409, %v977
      %v979 = vadd.f32 %v972, %v978
      %v980 = vadd.f32 %v979, 0.0
      %982 = vset.pattern.permute.xlu0 5
      %983 = vperm.xlu0 %982, %v665
      %v984 = vpop.permute.xlu0 %983
      %v986 = vperm.slane %v984, 0
      %v987 = vmul.f32 %v459, %v986
      %989 = vset.pattern.permute.xlu0 5
      %990 = vperm.xlu0 %989, %v671
      %v991 = vpop.permute.xlu0 %990
      %v993 = vperm.slane %v991, 0
      %v994 = vmul.f32 %v464, %v993
      %v995 = vadd.f32 %v987, %v994
      %997 = vset.pattern.permute.xlu0 5
      %998 = vperm.xlu0 %997, %v643
      %v999 = vpop.permute.xlu0 %998
      %v1001 = vperm.slane %v999, 0
      %v1002 = vmul.f32 %v438, %v1001
      %v1003 = vadd.f32 %v995, %v1002
      %v1004 = vadd.f32 %v965, 1.0
      %v1006 = vrot.slane %v980, 6
      %v1008 = vadd.f32 %v1004, %v1006
      %v1009 = vadd.f32 %v1008, %v1003
      %v1010 = vmax.f32 %v1009, 1e-08
      %v1011 = vrsqrt.pop %v1010
      %v1012 = vmul.f32 %v1011, %v1010
      %v1013 = vmul.f32 %v1012, %v1011
      %v1014 = vmul.f32 0.5, %v1013
      %v1015 = vsub.f32 1.5, %v1014
      %v1016 = vmul.f32 %v1011, %v1015
      %v1017 = vmul.f32 %v1010, %v1016
      %vm1018 = vcmp.eq.f32.partialorder %v1010, inf
      %v1019 = vsel %vm1018, %v1010, %v1017
      %vm1020 = vcmp.eq.f32.partialorder %v1010, 0.0
      %v1021 = vand.u32 %v1010, 2147483648
      %v1022 = vsel %vm1020, %v1021, %v1019
      %v1023 = vmul.f32 %v1022, 0.5
      %v1024 = vsub.f32 %v1004, %v1006
      %v1025 = vsub.f32 %v1024, %v1003
      %v1026 = vmax.f32 %v1025, 1e-08
      %v1027 = vrsqrt.pop %v1026
      %v1028 = vmul.f32 %v1027, %v1026
      %v1029 = vmul.f32 %v1028, %v1027
      %v1030 = vmul.f32 0.5, %v1029
      %v1031 = vsub.f32 1.5, %v1030
      %v1032 = vmul.f32 %v1027, %v1031
      %v1033 = vmul.f32 %v1026, %v1032
      %vm1034 = vcmp.eq.f32.partialorder %v1026, inf
      %v1035 = vsel %vm1034, %v1026, %v1033
      %vm1036 = vcmp.eq.f32.partialorder %v1026, 0.0
      %v1037 = vand.u32 %v1026, 2147483648
      %v1038 = vsel %vm1036, %v1037, %v1035
      %v1039 = vmul.f32 %v1038, 0.5
      %v1040 = vsub.f32 1.0, %v965
      %v1041 = vadd.f32 %v1040, %v1006
      %v1042 = vsub.f32 %v1041, %v1003
      %v1043 = vmax.f32 %v1042, 1e-08
      %v1044 = vrsqrt.pop %v1043
      %v1045 = vmul.f32 %v1044, %v1043
      %v1046 = vmul.f32 %v1045, %v1044
      %v1047 = vmul.f32 0.5, %v1046
      %v1048 = vsub.f32 1.5, %v1047
      %v1049 = vmul.f32 %v1044, %v1048
      %v1050 = vmul.f32 %v1043, %v1049
      %vm1051 = vcmp.eq.f32.partialorder %v1043, inf
      %v1052 = vsel %vm1051, %v1043, %v1050
      %vm1053 = vcmp.eq.f32.partialorder %v1043, 0.0
      %v1054 = vand.u32 %v1043, 2147483648
      %v1055 = vsel %vm1053, %v1054, %v1052
      %v1056 = vmul.f32 %v1055, 0.5
      %v1057 = vsub.f32 %v1040, %v1006
      %v1058 = vadd.f32 %v1057, %v1003
      %v1059 = vmax.f32 %v1058, 1e-08
      %v1060 = vrsqrt.pop %v1059
      %v1061 = vmul.f32 %v1060, %v1059
      %v1062 = vmul.f32 %v1061, %v1060
      %v1063 = vmul.f32 0.5, %v1062
      %v1064 = vsub.f32 1.5, %v1063
      %v1065 = vmul.f32 %v1060, %v1064
      %v1066 = vmul.f32 %v1059, %v1065
      %vm1067 = vcmp.eq.f32.partialorder %v1059, inf
      %v1068 = vsel %vm1067, %v1059, %v1066
      %vm1069 = vcmp.eq.f32.partialorder %v1059, 0.0
      %v1070 = vand.u32 %v1059, 2147483648
      %v1071 = vsel %vm1069, %v1070, %v1068
      %v1072 = vmul.f32 %v1071, 0.5
      %v1073 = vmul.f32 %v459, %v971
      %v1074 = vmul.f32 %v464, %v977
      %v1075 = vadd.f32 %v1073, %v1074
      %v1076 = vmul.f32 %v438, 0.0
      %v1077 = vadd.f32 %v1075, %v1076
      %v1078 = vmul.f32 %v458, %v986
      %v1079 = vmul.f32 %v409, %v993
      %v1080 = vadd.f32 %v1078, %v1079
      %v1081 = vmul.f32 %v1001, 0.0
      %v1082 = vadd.f32 %v1080, %v1081
      %v1084 = vrot.slane %v1082, 6
      %v1086 = vsub.f32 %v1077, %v1084
      %vm1087 = vcmp.lt.f32.partialorder %v1086, 0.0
      %v1088 = vsub.f32 0.0, %v1039
      %v1089 = vsel %vm1087, %v1088, %v1039
      %v1090 = vmul.f32 %v457, %v986
      %v1091 = vmul.f32 %v463, %v993
      %v1092 = vadd.f32 %v1090, %v1091
      %v1093 = vmul.f32 %v465, %v1001
      %v1094 = vadd.f32 %v1092, %v1093
      %v1095 = vmul.f32 %v459, %v948
      %v1096 = vmul.f32 %v464, %v955
      %v1097 = vadd.f32 %v1095, %v1096
      %v1098 = vmul.f32 %v438, %v963
      %v1099 = vadd.f32 %v1097, %v1098
      %v1100 = vsub.f32 %v1094, %v1099
      %vm1101 = vcmp.lt.f32.partialorder %v1100, 0.0
      %v1102 = vsub.f32 0.0, %v1056
      %v1103 = vsel %vm1101, %v1102, %v1056
      %v1104 = vmul.f32 %v458, %v948
      %v1105 = vmul.f32 %v409, %v955
      %v1106 = vadd.f32 %v1104, %v1105
      %v1107 = vmul.f32 %v963, 0.0
      %v1108 = vadd.f32 %v1106, %v1107
      %v1109 = vmul.f32 %v457, %v971
      %v1110 = vmul.f32 %v463, %v977
      %v1111 = vadd.f32 %v1109, %v1110
      %v1112 = vmul.f32 %v465, 0.0
      %v1113 = vadd.f32 %v1111, %v1112
      %v1115 = vrot.slane %v1113, 2
      %v1117 = vsub.f32 %v1108, %v1115
      %vm1118 = vcmp.lt.f32.partialorder %v1117, 0.0
      %v1119 = vsub.f32 0.0, %v1072
      %v1121 = vrot.slane %v1119, 2
      %v1124 = vrot.slane %v1072, 2
      %v1126 = vsel %vm1118, %v1121, %v1124
      %vm1127 = vcmask 39936
      %1128 = vst.msk [vmem:[%s374] sm:$0xff] %vm1127, %v721
      %1129 = vst.msk [vmem:[%s374 + $0x8] sm:$0xff] %vm1127, %v728
      %1130 = vst.msk [vmem:[%s374 + $0x10] sm:$0xff] %vm1127, %v736
      %1131 = vst.msk [vmem:[%s374 + $0x18] sm:$0xff] %vm1127, %v713
      %1132 = vst.msk [vmem:[%s374 + $0x20] sm:$0xff] %vm1127, %v818
      %1133 = vst.msk [vmem:[%s374 + $0x28] sm:$0xff] %vm1127, %v915
      %1134 = vst.msk [vmem:[%s374 + $0x30] sm:$0xff] %vm1127, %v932
      %1135 = vst.msk [vmem:[%s374 + $0x38] sm:$0xff] %vm1127, %v937
      %1136 = vst.msk [vmem:[%s374 + $0x40] sm:$0xff] %vm1127, %v942
      %v1138 = vrot.slane %v1023, 2
      %v1141 = vrot.slane %v1089, 1
      %v1144 = vrot.slane %v1126, 5
      %vm1146 = vcmask 1040384
      %v1147 = vsel %vm1146, %v1138, %v1141
      %vm1148 = vcmask 1041408
      %v1149 = vsel %vm1148, %v1147, %v1103
      %vm1150 = vcmask 1042432
      %v1151 = vsel %vm1150, %v1149, %v1144
      %vm1152 = vcmask 35840
      %1153 = vst.msk [vmem:[%s374 + $0x48] sm:$0xf] %vm1152, %v1151
      %p1154 = scmp.lt.s32.totalorder %s22, 1
      %s1155 = scalar_select %p1154, %s22, 1
      %s1156 = smul.addr %s1155, 2
      %s1157 = smul.addr %s1156, 8
      %s1158 = scalar_lea.vmem %s4, %s1157
      %p1159 = scmp.lt.s32.totalorder %s22, 1
      %s1160 = scalar_select %p1159, %s22, 1
      %s1161 = smul.addr %s1160, 6
      %s1162 = smul.addr %s1161, 8
      %s1163 = scalar_lea.vmem %s5, %s1162
      %p1164 = scmp.lt.s32.totalorder %s22, 1
      %s1165 = scalar_select %p1164, %s22, 1
      %p1166 = scmp.lt.s32.totalorder %s23, 4
      %s1167 = scalar_select %p1166, %s23, 4
      %s1168 = smul.addr %s1167, 10
      %s1169 = smul.addr %s1165, 50
      %s1170 = sadd.s32 %s1168, %s1169
      %s1171 = smul.addr %s1170, 8
      %s1172 = scalar_lea.vmem %s6, %s1171
      // Predicated region
      $region41: #{localizer_forward.1} parent=35 // pred_check
        %p1173 = pneg %p156
      $region42: #{localizer_forward.1} parent=35 // pred_check_branch
        %1175 = sbr.rel (%p1173) target = $region44
      $region43: #{localizer_forward.1} parent=35 // pred_region
        _
      $region44: #{localizer_forward.1} parent=35 // pred_fallthru
        _
      // Predicated region
      $region45: #{localizer_forward.1} parent=35 // pred_check
        %p1176 = pneg %p182
      $region46: #{localizer_forward.1} parent=35 // pred_check_branch
        %1178 = sbr.rel (%p1176) target = $region48
      $region47: #{localizer_forward.1} parent=35 // pred_region
        _
      $region48: #{localizer_forward.1} parent=35 // pred_fallthru
        _
      // Predicated region
      $region49: #{localizer_forward.1} parent=35 // pred_check
        %p1179 = pneg %p210
      $region50: #{localizer_forward.1} parent=35 // pred_check_branch
        %1181 = sbr.rel (%p1179) target = $region52
      $region51: #{localizer_forward.1} parent=35 // pred_region
        _
      $region52: #{localizer_forward.1} parent=35 // pred_fallthru
        _
    $region36: #{localizer_forward.1} parent=5 // pred_fallthru
      _
    %p1182 = scmp.le.s32.totalorder 2, %s13
    // Predicated region
    $region53: #{localizer_forward.1} parent=5 // pred_check
      %p1183 = pneg %p1182
    $region54: #{localizer_forward.1} parent=5 // pred_check_branch
      %1185 = sbr.rel (%p1183) target = $region56
    $region55: #{localizer_forward.1} parent=5 // pred_region
      %s1186 = ssub.s32 %s13, 2
      // Predicated region
      $region57: #{localizer_forward.1} parent=55 // pred_check
        %p1187 = pneg %p162
      $region58: #{localizer_forward.1} parent=55 // pred_check_branch
        %1189 = sbr.rel (%p1187) target = $region60
      $region59: #{localizer_forward.1} parent=55 // pred_region
        %p1190 = scmp.lt.s32.totalorder %s24, 1
        %s1191 = scalar_select %p1190, %s24, 1
        %s1192 = smul.addr %s1191, 2
        %s1193 = smul.addr %s1192, 8
        %s1194 = scalar_lea.vmem %s4, %s1193
      $region60: #{localizer_forward.1} parent=55 // pred_fallthru
        _
      // Predicated region
      $region61: #{localizer_forward.1} parent=55 // pred_check
        %p1195 = pneg %p188
      $region62: #{localizer_forward.1} parent=55 // pred_check_branch
        %1197 = sbr.rel (%p1195) target = $region64
      $region63: #{localizer_forward.1} parent=55 // pred_region
        %p1198 = scmp.lt.s32.totalorder %s24, 1
        %s1199 = scalar_select %p1198, %s24, 1
        %s1200 = smul.addr %s1199, 6
        %s1201 = smul.addr %s1200, 8
        %s1202 = scalar_lea.vmem %s5, %s1201
      $region64: #{localizer_forward.1} parent=55 // pred_fallthru
        _
      // Predicated region
      $region65: #{localizer_forward.1} parent=55 // pred_check
        %p1203 = pneg %p216
      $region66: #{localizer_forward.1} parent=55 // pred_check_branch
        %1205 = sbr.rel (%p1203) target = $region68
      $region67: #{localizer_forward.1} parent=55 // pred_region
        %p1206 = scmp.lt.s32.totalorder %s24, 1
        %s1207 = scalar_select %p1206, %s24, 1
        %p1208 = scmp.lt.s32.totalorder %s25, 4
        %s1209 = scalar_select %p1208, %s25, 4
        %s1210 = smul.addr %s1209, 10
        %s1211 = smul.addr %s1207, 50
        %s1212 = sadd.s32 %s1210, %s1211
        %s1213 = smul.addr %s1212, 8
        %s1214 = scalar_lea.vmem %s6, %s1213
      $region68: #{localizer_forward.1} parent=55 // pred_fallthru
        _
    $region56: #{localizer_forward.1} parent=5 // pred_fallthru
      _
  $region6: #{localizer_forward.1} parent=0 // loop_footer
    %s17 = sadd.s32 1, %s13
  $region7: #{localizer_forward.1} parent=0 // loop_footer_branch
    %12 = sbr.rel target = $region3
  $region8: #{localizer_forward.1} parent=0 // loop_exit
    _

</llo_original>
